<compile_context>
chip_gen: v7x
topology: tpu7x:2x2x1
jax: 0.10.0
libtpu: 0.0.40
codegen_flags: <defaults>
</compile_context>

<pallas_src>
import functools
import math

import jax
import jax.numpy as jnp
from jax import lax
from jax.experimental import pallas as pl
from jax.experimental.pallas import tpu as pltpu


# ----------------------------- shared helpers ------------------------------

def _layernorm(x, w, b, eps=1e-5):
    # PyTorch nn.LayerNorm: biased variance, eps inside rsqrt.
    mu = jnp.mean(x, axis=-1, keepdims=True)
    xc = x - mu
    var = jnp.mean(xc * xc, axis=-1, keepdims=True)
    return xc * lax.rsqrt(var + eps) * w + b


# -------------------------------- kernel ------------------------------------

def continuity_bert_kernel(
    x_ref,                                   # (1, S, Din) f32     (per-batch)
    wemb_ref, bemb_ref,                      # (Din, D) bf16, (1, D) f32
    qkvw_ref, qkvb_ref,                      # (1, D, 3D) bf16, (1, 1, 3D) f32
    ow_ref, ob_ref,                          # (1, D, D) bf16, (1, 1, D) f32
    ln1w_ref, ln1b_ref,                      # (1, 1, D) f32
    f1w_ref, f1b_ref,                        # (1, D, Dff) bf16, (1, 1, Dff) f32
    f2w_ref, f2b_ref,                        # (1, Dff, D) bf16, (1, 1, D) f32
    ln2w_ref, ln2b_ref,                      # (1, 1, D) f32
    pw_ref, pb_ref,                          # (1, D) bf16, (1, 1) f32
    out_ref,                                 # (1, 1, S) f32       (per-batch)
    h_ref,                                   # scratch: (S, D) f32, carried over layers
    *, n_heads):
    l = pl.program_id(1)
    n_l = pl.num_programs(1)
    S, D = h_ref.shape
    H = n_heads
    hd = D // H
    scale = 1.0 / math.sqrt(hd)
    bf16 = jnp.bfloat16
    f32 = jnp.float32

    # ---- embedder: run once per batch element (first layer step) ----
    @pl.when(l == 0)
    def _embed():
        x = x_ref[0].astype(bf16)                                  # (S, Din)
        h_ref[...] = (jnp.dot(x, wemb_ref[...],
                              preferred_element_type=f32) + bemb_ref[...])

    h = h_ref[...]                                                 # (S, D) f32

    # ---- self-attention block (head-batched, post-norm) ----
    qkv = (jnp.dot(h.astype(bf16), qkvw_ref[0],
                   preferred_element_type=f32) + qkvb_ref[0])      # (S, 3D)
    q = qkv[:, 0 * D:1 * D] * scale                                # fold 1/sqrt(hd) here
    k = qkv[:, 1 * D:2 * D]                                        # 128-aligned slices
    v = qkv[:, 2 * D:3 * D]
    qh = q.reshape(S, H, hd).transpose(1, 0, 2).astype(bf16)       # (H, S, hd)
    kh = k.reshape(S, H, hd).transpose(1, 0, 2).astype(bf16)
    vh = v.reshape(S, H, hd).transpose(1, 0, 2).astype(bf16)
    s = lax.dot_general(qh, kh, (((2,), (2,)), ((0,), (0,))),
                        preferred_element_type=f32)                # (H, S, S)
    m = jnp.max(s, axis=-1, keepdims=True)
    e = jnp.exp(s - m)
    p_attn = e * pl.reciprocal(jnp.sum(e, axis=-1, keepdims=True), approx=True)
    ctx = lax.dot_general(p_attn.astype(bf16), vh,
                          (((2,), (1,)), ((0,), (0,))),
                          preferred_element_type=f32)              # (H, S, hd)
    attn = ctx.transpose(1, 0, 2).reshape(S, D)                    # (S, D)
    attn = (jnp.dot(attn.astype(bf16), ow_ref[0],
                    preferred_element_type=f32) + ob_ref[0])
    h = _layernorm(h + attn, ln1w_ref[0], ln1b_ref[0])

    # ---- feed-forward block (relu) ----
    ff = (jnp.dot(h.astype(bf16), f1w_ref[0],
                  preferred_element_type=f32) + f1b_ref[0])
    ff = jnp.maximum(ff, 0.0)
    ff = (jnp.dot(ff.astype(bf16), f2w_ref[0],
                  preferred_element_type=f32) + f2b_ref[0])
    h = _layernorm(h + ff, ln2w_ref[0], ln2b_ref[0])
    h_ref[...] = h

    # ---- final projection + softmax over the sequence (last layer step) ----
    @pl.when(l == n_l - 1)
    def _finalize():
        logits = lax.dot_general(pw_ref[...], h.astype(bf16),
                                 (((1,), (1,)), ((), ())),
                                 preferred_element_type=f32) + pb_ref[...]   # (1, S)
        m2 = jnp.max(logits, axis=-1, keepdims=True)
        e2 = jnp.exp(logits - m2)
        out_ref[0] = e2 / jnp.sum(e2, axis=-1, keepdims=True)     # exact final softmax


# -------------------------------- wrapper ------------------------------------

def continuity_bert_forward(x, params, *, n_layers, n_heads):
    B, S, Din = x.shape
    D = params['w_emb'].shape[1]
    Dff = params['ff1_w'].shape[2]
    L = n_layers
    assert params['qkv_w'].shape[0] == L
    bf16 = jnp.bfloat16

    # Weight matrices in bf16 (halves DMA, 2-4x MXU rate); biases / LN stay f32.
    wemb = params['w_emb'].astype(bf16)
    qkvw = params['qkv_w'].astype(bf16)
    ow = params['out_w'].astype(bf16)
    f1w = params['ff1_w'].astype(bf16)
    f2w = params['ff2_w'].astype(bf16)
    pw = params['proj_w'].astype(bf16)
    bemb = params['b_emb']
    # Per-layer vectors reshaped to (L, 1, dim) so every block is (1, 1, dim)
    # (last two block dims equal the full array dims -> layout-safe).
    qkvb = params['qkv_b'][:, None, :]
    ob = params['out_b'][:, None, :]
    ln1w = params['ln1_w'][:, None, :]
    ln1b = params['ln1_b'][:, None, :]
    f1b = params['ff1_b'][:, None, :]
    f2b = params['ff2_b'][:, None, :]
    ln2w = params['ln2_w'][:, None, :]
    ln2b = params['ln2_b'][:, None, :]
    pb = params['proj_b']

    kernel = functools.partial(continuity_bert_kernel, n_heads=n_heads)

    def const_spec(shape):
        return pl.BlockSpec(shape, lambda b, l, _n=len(shape): (0,) * _n)

    def per_layer_spec(shape):
        return pl.BlockSpec((1,) + shape, lambda b, l: (l, 0, 0))

    in_specs = [
        pl.BlockSpec((1, S, Din), lambda b, l: (b, 0, 0)),   # x (per batch element)
        const_spec((Din, D)),                                # w_emb
        const_spec((1, D)),                                  # b_emb
        per_layer_spec((D, 3 * D)), per_layer_spec((1, 3 * D)),   # qkv w / b
        per_layer_spec((D, D)), per_layer_spec((1, D)),           # out-proj w / b
        per_layer_spec((1, D)), per_layer_spec((1, D)),           # ln1 w / b
        per_layer_spec((D, Dff)), per_layer_spec((1, Dff)),       # ff1 w / b
        per_layer_spec((Dff, D)), per_layer_spec((1, D)),         # ff2 w / b
        per_layer_spec((1, D)), per_layer_spec((1, D)),           # ln2 w / b
        const_spec((1, D)),                                  # proj_w
        const_spec((1, 1)),                                  # proj_b
    ]
    out_specs = pl.BlockSpec((1, 1, S), lambda b, l: (b, 0, 0))

    out = pl.pallas_call(
        kernel,
        grid=(B, L),
        in_specs=in_specs,
        out_specs=out_specs,
        out_shape=jax.ShapeDtypeStruct((B, 1, S), jnp.float32),
        scratch_shapes=[pltpu.VMEM((S, D), jnp.float32)],    # h carried across layers
        compiler_params=pltpu.CompilerParams(
            dimension_semantics=("parallel", "arbitrary"),
            vmem_limit_bytes=32 << 20),
    )(x, wemb, bemb, qkvw, qkvb, ow, ob, ln1w, ln1b,
      f1w, f1b, f2w, f2b, ln2w, ln2b, pw, pb)
    return out.reshape(B, S)


# --------------------------- parameter setup ---------------------------------

def init_params(key, *, input_dim, d_model, d_ff, n_layers):
    """Deterministic synthetic initialization (shapes match the nn.Module)."""
    ks = jax.random.split(key, 10)
    w = lambda k, shape: (0.05 * jax.random.normal(k, shape)).astype(jnp.float32)
    L, D, Dff = n_layers, d_model, d_ff
    return {
        'w_emb': w(ks[0], (input_dim, D)),
        'b_emb': w(ks[1], (1, D)),
        'qkv_w': w(ks[2], (L, D, 3 * D)),
        'qkv_b': w(ks[3], (L, 3 * D)),
        'out_w': w(ks[4], (L, D, D)),
        'out_b': w(ks[5], (L, D)),
        'ln1_w': jnp.ones((L, D), jnp.float32),
        'ln1_b': jnp.zeros((L, D), jnp.float32),
        'ff1_w': w(ks[6], (L, D, Dff)),
        'ff1_b': w(ks[7], (L, Dff)),
        'ff2_w': w(ks[8], (L, Dff, D)),
        'ff2_b': w(ks[9], (L, D)),
        'ln2_w': jnp.ones((L, D), jnp.float32),
        'ln2_b': jnp.zeros((L, D), jnp.float32),
        'proj_w': w(jax.random.fold_in(key, 100), (1, D)),
        'proj_b': w(jax.random.fold_in(key, 101), (1, 1)),
    }


# ------------------------- pure-JAX reference --------------------------------
# Mirrors the kernel's numerics (bf16 matmul operands, f32 accumulation,
# scale folded into Q) so the comparison is policy-matched; attention
# softmax uses an exact divide (kernel uses approx reciprocal).

def reference_forward(x, p, *, n_layers, n_heads):
    bf16, f32 = jnp.bfloat16, jnp.float32
    B, S, _ = x.shape
    D = p['w_emb'].shape[1]
    H, hd = n_heads, D // n_heads
    scale = 1.0 / math.sqrt(hd)

    def mm(a, w):
        return jnp.dot(a.astype(bf16), w.astype(bf16), preferred_element_type=f32)

    outs = []
    for b in range(B):
        h = mm(x[b], p['w_emb']) + p['b_emb']                      # (S, D)
        for l in range(n_layers):
            qkv = mm(h, p['qkv_w'][l]) + p['qkv_b'][l]
            q, k, v = qkv[:, :D] * scale, qkv[:, D:2 * D], qkv[:, 2 * D:]
            qh = q.reshape(S, H, hd).transpose(1, 0, 2).astype(bf16)
            kh = k.reshape(S, H, hd).transpose(1, 0, 2).astype(bf16)
            vh = v.reshape(S, H, hd).transpose(1, 0, 2).astype(bf16)
            s = lax.dot_general(qh, kh, (((2,), (2,)), ((0,), (0,))),
                                preferred_element_type=f32)
            pmat = jax.nn.softmax(s, axis=-1)
            ctx = lax.dot_general(pmat.astype(bf16), vh,
                                  (((2,), (1,)), ((0,), (0,))),
                                  preferred_element_type=f32)
            attn = ctx.transpose(1, 0, 2).reshape(S, D)
            attn = mm(attn, p['out_w'][l]) + p['out_b'][l]
            h = _layernorm(h + attn, p['ln1_w'][l], p['ln1_b'][l])
            ff = jnp.maximum(mm(h, p['ff1_w'][l]) + p['ff1_b'][l], 0.0)
            ff = mm(ff, p['ff2_w'][l]) + p['ff2_b'][l]
            h = _layernorm(h + ff, p['ln2_w'][l], p['ln2_b'][l])
        logits = lax.dot_general(p['proj_w'].astype(bf16), h.astype(bf16),
                                 (((1,), (1,)), ((), ())),
                                 preferred_element_type=f32) + p['proj_b']
        outs.append(jax.nn.softmax(logits, axis=-1)[0])
    return jnp.stack(outs)


# --------------------------------- main ---------------------------------------

if __name__ == "__main__":
    # Small, module-consistent config:
    #   n_heads=4, hidden_dim=32 -> full_hidden_dim = 128 = dim_feedforward
    #   n_layers=2, input_dim=128, batch=2, seq_len=8
    N_HEADS, HIDDEN_DIM, N_LAYERS, INPUT_DIM = 4, 32, 2, 128
    D_MODEL = N_HEADS * HIDDEN_DIM
    B, S = 2, 8

    root = jax.random.PRNGKey(0)
    kx, kp = jax.random.split(root)
    params = init_params(kp, input_dim=INPUT_DIM, d_model=D_MODEL,
                         d_ff=D_MODEL, n_layers=N_LAYERS)
    x = jax.random.normal(kx, (B, S, INPUT_DIM), jnp.float32)

    out = jax.block_until_ready(
        continuity_bert_forward(x, params, n_layers=N_LAYERS, n_heads=N_HEADS))
    ref = reference_forward(x, params, n_layers=N_LAYERS, n_heads=N_HEADS)

    assert out.shape == (B, S)
    assert bool(jnp.all(jnp.isfinite(out)))
    assert bool(jnp.allclose(jnp.sum(out, axis=-1), 1.0, atol=1e-5))
    # bf16 policy is mirrored in the reference; remaining delta is the
    # approx-reciprocal in the attention softmax (well under 2e-3).
    assert bool(jnp.allclose(out, ref, atol=2e-3, rtol=2e-3))
    print("KERNEL_OK")
</pallas_src>

<mosaic_0001>
module attributes {stable_mosaic.version = 11 : i64} {
  func.func @continuity_bert_kernel(%arg0: i32, %arg1: i32, %arg2: memref<1x8x128xf32, #tpu.memory_space<vmem>>, %arg3: memref<128x128xbf16, #tpu.memory_space<vmem>>, %arg4: memref<1x128xf32, #tpu.memory_space<vmem>>, %arg5: memref<1x128x384xbf16, #tpu.memory_space<vmem>>, %arg6: memref<1x1x384xf32, #tpu.memory_space<vmem>>, %arg7: memref<1x128x128xbf16, #tpu.memory_space<vmem>>, %arg8: memref<1x1x128xf32, #tpu.memory_space<vmem>>, %arg9: memref<1x1x128xf32, #tpu.memory_space<vmem>>, %arg10: memref<1x1x128xf32, #tpu.memory_space<vmem>>, %arg11: memref<1x128x128xbf16, #tpu.memory_space<vmem>>, %arg12: memref<1x1x128xf32, #tpu.memory_space<vmem>>, %arg13: memref<1x128x128xbf16, #tpu.memory_space<vmem>>, %arg14: memref<1x1x128xf32, #tpu.memory_space<vmem>>, %arg15: memref<1x1x128xf32, #tpu.memory_space<vmem>>, %arg16: memref<1x1x128xf32, #tpu.memory_space<vmem>>, %arg17: memref<1x128xbf16, #tpu.memory_space<vmem>>, %arg18: memref<1x1xf32, #tpu.memory_space<vmem>>, %arg19: memref<1x1x8xf32, #tpu.memory_space<vmem>>, %arg20: memref<8x128xf32, #tpu.memory_space<vmem>>) attributes {dimension_semantics = [#tpu.dimension_semantics<parallel>, #tpu.dimension_semantics<arbitrary>], iteration_bounds = array<i64: 2, 2>, scalar_prefetch = 0 : i64, scratch_operands = 1 : i64, tpu.core_type = #tpu.core_type<tc>, window_params = [{transform_indices = @transform_0, window_bounds = array<i64: 1, 8, 128>}, {pipeline_mode = #tpu.pipeline_mode<synchronous>, transform_indices = @transform_1, window_bounds = array<i64: 128, 128>}, {pipeline_mode = #tpu.pipeline_mode<synchronous>, transform_indices = @transform_2, window_bounds = array<i64: 1, 128>}, {transform_indices = @transform_3, window_bounds = array<i64: 1, 128, 384>}, {transform_indices = @transform_4, window_bounds = array<i64: 1, 1, 384>}, {transform_indices = @transform_5, window_bounds = array<i64: 1, 128, 128>}, {transform_indices = @transform_6, window_bounds = array<i64: 1, 1, 128>}, {transform_indices = @transform_7, window_bounds = array<i64: 1, 1, 128>}, {transform_indices = @transform_8, window_bounds = array<i64: 1, 1, 128>}, {transform_indices = @transform_9, window_bounds = array<i64: 1, 128, 128>}, {transform_indices = @transform_10, window_bounds = array<i64: 1, 1, 128>}, {transform_indices = @transform_11, window_bounds = array<i64: 1, 128, 128>}, {transform_indices = @transform_12, window_bounds = array<i64: 1, 1, 128>}, {transform_indices = @transform_13, window_bounds = array<i64: 1, 1, 128>}, {transform_indices = @transform_14, window_bounds = array<i64: 1, 1, 128>}, {pipeline_mode = #tpu.pipeline_mode<synchronous>, transform_indices = @transform_15, window_bounds = array<i64: 1, 128>}, {pipeline_mode = #tpu.pipeline_mode<synchronous>, transform_indices = @transform_16, window_bounds = array<i64: 1, 1>}, {transform_indices = @transform_17, window_bounds = array<i64: 1, 1, 8>}]} {
    %c0_i32 = arith.constant 0 : i32
    %0 = arith.cmpi eq, %arg1, %c0_i32 : i32
    %1 = arith.extui %0 : i1 to i32
    %c0_i32_0 = arith.constant 0 : i32
    %2 = arith.cmpi ne, %1, %c0_i32_0 : i32
    scf.if %2 {
      %c0_60 = arith.constant 0 : index
      %c0_61 = arith.constant 0 : index
      %c0_62 = arith.constant 0 : index
      %121 = vector.load %arg2[%c0_60, %c0_61, %c0_62] : memref<1x8x128xf32, #tpu.memory_space<vmem>>, vector<1x8x128xf32>
      %122 = vector.shape_cast %121 : vector<1x8x128xf32> to vector<8x128xf32>
      %123 = arith.truncf %122 : vector<8x128xf32> to vector<8x128xbf16>
      %c0_63 = arith.constant 0 : index
      %c0_64 = arith.constant 0 : index
      %124 = vector.load %arg3[%c0_63, %c0_64] : memref<128x128xbf16, #tpu.memory_space<vmem>>, vector<128x128xbf16>
      %cst_65 = arith.constant dense<0.000000e+00> : vector<8x128xf32>
      %125 = tpu.matmul %123, %124, %cst_65 {dimension_numbers = #tpu.dot_dimension_numbers<[1], [0], [0], [1], [0, 0, 1, 1], [], []>} : vector<8x128xbf16>, vector<128x128xbf16>, vector<8x128xf32> -> vector<8x128xf32>
      %c0_66 = arith.constant 0 : index
      %c0_67 = arith.constant 0 : index
      %126 = vector.load %arg4[%c0_66, %c0_67] : memref<1x128xf32, #tpu.memory_space<vmem>>, vector<1x128xf32>
      %127 = vector.broadcast %126 : vector<1x128xf32> to vector<8x128xf32>
      %128 = arith.addf %125, %127 : vector<8x128xf32>
      %c0_68 = arith.constant 0 : index
      %c0_69 = arith.constant 0 : index
      %129 = vector.load %arg20[%c0_68, %c0_69] : memref<8x128xf32, #tpu.memory_space<vmem>>, vector<8x128xf32>
      tpu.vector_store %arg20[%c0_68, %c0_69], %128 {strides = array<i32>} : memref<8x128xf32, #tpu.memory_space<vmem>>, vector<8x128xf32>,
    } else {
    }
    %c0 = arith.constant 0 : index
    %c0_1 = arith.constant 0 : index
    %3 = vector.load %arg20[%c0, %c0_1] : memref<8x128xf32, #tpu.memory_space<vmem>>, vector<8x128xf32>
    %4 = arith.truncf %3 : vector<8x128xf32> to vector<8x128xbf16>
    %c0_2 = arith.constant 0 : index
    %c0_3 = arith.constant 0 : index
    %c0_4 = arith.constant 0 : index
    %5 = vector.load %arg5[%c0_2, %c0_3, %c0_4] : memref<1x128x384xbf16, #tpu.memory_space<vmem>>, vector<1x128x384xbf16>
    %6 = vector.shape_cast %5 : vector<1x128x384xbf16> to vector<128x384xbf16>
    %cst = arith.constant dense<0.000000e+00> : vector<8x384xf32>
    %7 = tpu.matmul %4, %6, %cst {dimension_numbers = #tpu.dot_dimension_numbers<[1], [0], [0], [1], [0, 0, 1, 1], [], []>} : vector<8x128xbf16>, vector<128x384xbf16>, vector<8x384xf32> -> vector<8x384xf32>
    %c0_5 = arith.constant 0 : index
    %c0_6 = arith.constant 0 : index
    %c0_7 = arith.constant 0 : index
    %8 = vector.load %arg6[%c0_5, %c0_6, %c0_7] : memref<1x1x384xf32, #tpu.memory_space<vmem>>, vector<1x1x384xf32>
    %9 = vector.shape_cast %8 : vector<1x1x384xf32> to vector<1x384xf32>
    %10 = vector.broadcast %9 : vector<1x384xf32> to vector<8x384xf32>
    %11 = arith.addf %7, %10 : vector<8x384xf32>
    %12 = vector.extract_strided_slice %11 {offsets = [0, 0], sizes = [8, 128], strides = [1, 1]} : vector<8x384xf32> to vector<8x128xf32>
    %cst_8 = arith.constant 0.176776692 : f32
    %13 = vector.broadcast %cst_8 : f32 to vector<8x128xf32>
    %14 = arith.mulf %12, %13 : vector<8x128xf32>
    %15 = vector.extract_strided_slice %11 {offsets = [0, 128], sizes = [8, 128], strides = [1, 1]} : vector<8x384xf32> to vector<8x128xf32>
    %16 = vector.extract_strided_slice %11 {offsets = [0, 256], sizes = [8, 128], strides = [1, 1]} : vector<8x384xf32> to vector<8x128xf32>
    %17 = vector.shape_cast %14 : vector<8x128xf32> to vector<8x4x32xf32>
    %18 = tpu.transpose %17, [1, 0, 2] : vector<8x4x32xf32> -> vector<4x8x32xf32>
    %19 = arith.truncf %18 : vector<4x8x32xf32> to vector<4x8x32xbf16>
    %20 = vector.shape_cast %15 : vector<8x128xf32> to vector<8x4x32xf32>
    %21 = tpu.transpose %20, [1, 0, 2] : vector<8x4x32xf32> -> vector<4x8x32xf32>
    %22 = arith.truncf %21 : vector<4x8x32xf32> to vector<4x8x32xbf16>
    %23 = vector.shape_cast %16 : vector<8x128xf32> to vector<8x4x32xf32>
    %24 = tpu.transpose %23, [1, 0, 2] : vector<8x4x32xf32> -> vector<4x8x32xf32>
    %25 = arith.truncf %24 : vector<4x8x32xf32> to vector<4x8x32xbf16>
    %cst_9 = arith.constant dense<0.000000e+00> : vector<4x8x8xf32>
    %26 = tpu.matmul %19, %22, %cst_9 {dimension_numbers = #tpu.dot_dimension_numbers<[2], [2], [1], [1], [0, 0, 0, 1, 1, 1], [0], [0]>} : vector<4x8x32xbf16>, vector<4x8x32xbf16>, vector<4x8x8xf32> -> vector<4x8x8xf32>
    %cst_10 = arith.constant dense<0xFF800000> : vector<4x8xf32>
    %27 = vector.multi_reduction <maximumf>, %26, %cst_10 [2] : vector<4x8x8xf32> to vector<4x8xf32>
    %28 = vector.shape_cast %27 : vector<4x8xf32> to vector<4x8x1xf32>
    %29 = vector.broadcast %28 : vector<4x8x1xf32> to vector<4x8x8xf32>
    %30 = arith.subf %26, %29 : vector<4x8x8xf32>
    %31 = math.exp %30 : vector<4x8x8xf32>
    %cst_11 = arith.constant dense<0.000000e+00> : vector<4x8xf32>
    %32 = vector.multi_reduction <add>, %31, %cst_11 [2] : vector<4x8x8xf32> to vector<4x8xf32>
    %33 = vector.shape_cast %32 : vector<4x8xf32> to vector<4x8x1xf32>
    %34 = tpu.reciprocal %33 {approx = true} : vector<4x8x1xf32> -> vector<4x8x1xf32>
    %35 = vector.broadcast %34 : vector<4x8x1xf32> to vector<4x8x8xf32>
    %36 = arith.mulf %31, %35 : vector<4x8x8xf32>
    %37 = arith.truncf %36 : vector<4x8x8xf32> to vector<4x8x8xbf16>
    %cst_12 = arith.constant dense<0.000000e+00> : vector<4x8x32xf32>
    %38 = tpu.matmul %37, %25, %cst_12 {dimension_numbers = #tpu.dot_dimension_numbers<[2], [1], [1], [2], [0, 0, 0, 1, 1, 2], [0], [0]>} : vector<4x8x8xbf16>, vector<4x8x32xbf16>, vector<4x8x32xf32> -> vector<4x8x32xf32>
    %39 = tpu.transpose %38, [1, 0, 2] : vector<4x8x32xf32> -> vector<8x4x32xf32>
    %40 = vector.shape_cast %39 : vector<8x4x32xf32> to vector<8x128xf32>
    %41 = arith.truncf %40 : vector<8x128xf32> to vector<8x128xbf16>
    %c0_13 = arith.constant 0 : index
    %c0_14 = arith.constant 0 : index
    %c0_15 = arith.constant 0 : index
    %42 = vector.load %arg7[%c0_13, %c0_14, %c0_15] : memref<1x128x128xbf16, #tpu.memory_space<vmem>>, vector<1x128x128xbf16>
    %43 = vector.shape_cast %42 : vector<1x128x128xbf16> to vector<128x128xbf16>
    %cst_16 = arith.constant dense<0.000000e+00> : vector<8x128xf32>
    %44 = tpu.matmul %41, %43, %cst_16 {dimension_numbers = #tpu.dot_dimension_numbers<[1], [0], [0], [1], [0, 0, 1, 1], [], []>} : vector<8x128xbf16>, vector<128x128xbf16>, vector<8x128xf32> -> vector<8x128xf32>
    %c0_17 = arith.constant 0 : index
    %c0_18 = arith.constant 0 : index
    %c0_19 = arith.constant 0 : index
    %45 = vector.load %arg8[%c0_17, %c0_18, %c0_19] : memref<1x1x128xf32, #tpu.memory_space<vmem>>, vector<1x1x128xf32>
    %46 = vector.shape_cast %45 : vector<1x1x128xf32> to vector<1x128xf32>
    %47 = vector.broadcast %46 : vector<1x128xf32> to vector<8x128xf32>
    %48 = arith.addf %44, %47 : vector<8x128xf32>
    %49 = arith.addf %3, %48 : vector<8x128xf32>
    %c0_20 = arith.constant 0 : index
    %c0_21 = arith.constant 0 : index
    %c0_22 = arith.constant 0 : index
    %50 = vector.load %arg9[%c0_20, %c0_21, %c0_22] : memref<1x1x128xf32, #tpu.memory_space<vmem>>, vector<1x1x128xf32>
    %51 = vector.shape_cast %50 : vector<1x1x128xf32> to vector<1x128xf32>
    %c0_23 = arith.constant 0 : index
    %c0_24 = arith.constant 0 : index
    %c0_25 = arith.constant 0 : index
    %52 = vector.load %arg10[%c0_23, %c0_24, %c0_25] : memref<1x1x128xf32, #tpu.memory_space<vmem>>, vector<1x1x128xf32>
    %53 = vector.shape_cast %52 : vector<1x1x128xf32> to vector<1x128xf32>
    %cst_26 = arith.constant dense<0.000000e+00> : vector<8xf32>
    %54 = vector.multi_reduction <add>, %49, %cst_26 [1] : vector<8x128xf32> to vector<8xf32>
    %55 = vector.shape_cast %54 : vector<8xf32> to vector<8x1xf32>
    %cst_27 = arith.constant 1.280000e+02 : f32
    %56 = vector.broadcast %cst_27 : f32 to vector<8x1xf32>
    %57 = arith.divf %55, %56 : vector<8x1xf32>
    %58 = vector.broadcast %57 : vector<8x1xf32> to vector<8x128xf32>
    %59 = arith.subf %49, %58 : vector<8x128xf32>
    %60 = arith.mulf %59, %59 : vector<8x128xf32>
    %cst_28 = arith.constant dense<0.000000e+00> : vector<8xf32>
    %61 = vector.multi_reduction <add>, %60, %cst_28 [1] : vector<8x128xf32> to vector<8xf32>
    %62 = vector.shape_cast %61 : vector<8xf32> to vector<8x1xf32>
    %cst_29 = arith.constant 1.280000e+02 : f32
    %63 = vector.broadcast %cst_29 : f32 to vector<8x1xf32>
    %64 = arith.divf %62, %63 : vector<8x1xf32>
    %cst_30 = arith.constant 9.99999974E-6 : f32
    %65 = vector.broadcast %cst_30 : f32 to vector<8x1xf32>
    %66 = arith.addf %64, %65 : vector<8x1xf32>
    %67 = math.rsqrt %66 : vector<8x1xf32>
    %68 = vector.broadcast %67 : vector<8x1xf32> to vector<8x128xf32>
    %69 = arith.mulf %59, %68 : vector<8x128xf32>
    %70 = vector.broadcast %51 : vector<1x128xf32> to vector<8x128xf32>
    %71 = arith.mulf %69, %70 : vector<8x128xf32>
    %72 = vector.broadcast %53 : vector<1x128xf32> to vector<8x128xf32>
    %73 = arith.addf %71, %72 : vector<8x128xf32>
    %74 = arith.truncf %73 : vector<8x128xf32> to vector<8x128xbf16>
    %c0_31 = arith.constant 0 : index
    %c0_32 = arith.constant 0 : index
    %c0_33 = arith.constant 0 : index
    %75 = vector.load %arg11[%c0_31, %c0_32, %c0_33] : memref<1x128x128xbf16, #tpu.memory_space<vmem>>, vector<1x128x128xbf16>
    %76 = vector.shape_cast %75 : vector<1x128x128xbf16> to vector<128x128xbf16>
    %cst_34 = arith.constant dense<0.000000e+00> : vector<8x128xf32>
    %77 = tpu.matmul %74, %76, %cst_34 {dimension_numbers = #tpu.dot_dimension_numbers<[1], [0], [0], [1], [0, 0, 1, 1], [], []>} : vector<8x128xbf16>, vector<128x128xbf16>, vector<8x128xf32> -> vector<8x128xf32>
    %c0_35 = arith.constant 0 : index
    %c0_36 = arith.constant 0 : index
    %c0_37 = arith.constant 0 : index
    %78 = vector.load %arg12[%c0_35, %c0_36, %c0_37] : memref<1x1x128xf32, #tpu.memory_space<vmem>>, vector<1x1x128xf32>
    %79 = vector.shape_cast %78 : vector<1x1x128xf32> to vector<1x128xf32>
    %80 = vector.broadcast %79 : vector<1x128xf32> to vector<8x128xf32>
    %81 = arith.addf %77, %80 : vector<8x128xf32>
    %cst_38 = arith.constant 0.000000e+00 : f32
    %82 = vector.broadcast %cst_38 : f32 to vector<8x128xf32>
    %83 = arith.maximumf %81, %82 : vector<8x128xf32>
    %84 = arith.truncf %83 : vector<8x128xf32> to vector<8x128xbf16>
    %c0_39 = arith.constant 0 : index
    %c0_40 = arith.constant 0 : index
    %c0_41 = arith.constant 0 : index
    %85 = vector.load %arg13[%c0_39, %c0_40, %c0_41] : memref<1x128x128xbf16, #tpu.memory_space<vmem>>, vector<1x128x128xbf16>
    %86 = vector.shape_cast %85 : vector<1x128x128xbf16> to vector<128x128xbf16>
    %cst_42 = arith.constant dense<0.000000e+00> : vector<8x128xf32>
    %87 = tpu.matmul %84, %86, %cst_42 {dimension_numbers = #tpu.dot_dimension_numbers<[1], [0], [0], [1], [0, 0, 1, 1], [], []>} : vector<8x128xbf16>, vector<128x128xbf16>, vector<8x128xf32> -> vector<8x128xf32>
    %c0_43 = arith.constant 0 : index
    %c0_44 = arith.constant 0 : index
    %c0_45 = arith.constant 0 : index
    %88 = vector.load %arg14[%c0_43, %c0_44, %c0_45] : memref<1x1x128xf32, #tpu.memory_space<vmem>>, vector<1x1x128xf32>
    %89 = vector.shape_cast %88 : vector<1x1x128xf32> to vector<1x128xf32>
    %90 = vector.broadcast %89 : vector<1x128xf32> to vector<8x128xf32>
    %91 = arith.addf %87, %90 : vector<8x128xf32>
    %92 = arith.addf %73, %91 : vector<8x128xf32>
    %c0_46 = arith.constant 0 : index
    %c0_47 = arith.constant 0 : index
    %c0_48 = arith.constant 0 : index
    %93 = vector.load %arg15[%c0_46, %c0_47, %c0_48] : memref<1x1x128xf32, #tpu.memory_space<vmem>>, vector<1x1x128xf32>
    %94 = vector.shape_cast %93 : vector<1x1x128xf32> to vector<1x128xf32>
    %c0_49 = arith.constant 0 : index
    %c0_50 = arith.constant 0 : index
    %c0_51 = arith.constant 0 : index
    %95 = vector.load %arg16[%c0_49, %c0_50, %c0_51] : memref<1x1x128xf32, #tpu.memory_space<vmem>>, vector<1x1x128xf32>
    %96 = vector.shape_cast %95 : vector<1x1x128xf32> to vector<1x128xf32>
    %cst_52 = arith.constant dense<0.000000e+00> : vector<8xf32>
    %97 = vector.multi_reduction <add>, %92, %cst_52 [1] : vector<8x128xf32> to vector<8xf32>
    %98 = vector.shape_cast %97 : vector<8xf32> to vector<8x1xf32>
    %cst_53 = arith.constant 1.280000e+02 : f32
    %99 = vector.broadcast %cst_53 : f32 to vector<8x1xf32>
    %100 = arith.divf %98, %99 : vector<8x1xf32>
    %101 = vector.broadcast %100 : vector<8x1xf32> to vector<8x128xf32>
    %102 = arith.subf %92, %101 : vector<8x128xf32>
    %103 = arith.mulf %102, %102 : vector<8x128xf32>
    %cst_54 = arith.constant dense<0.000000e+00> : vector<8xf32>
    %104 = vector.multi_reduction <add>, %103, %cst_54 [1] : vector<8x128xf32> to vector<8xf32>
    %105 = vector.shape_cast %104 : vector<8xf32> to vector<8x1xf32>
    %cst_55 = arith.constant 1.280000e+02 : f32
    %106 = vector.broadcast %cst_55 : f32 to vector<8x1xf32>
    %107 = arith.divf %105, %106 : vector<8x1xf32>
    %cst_56 = arith.constant 9.99999974E-6 : f32
    %108 = vector.broadcast %cst_56 : f32 to vector<8x1xf32>
    %109 = arith.addf %107, %108 : vector<8x1xf32>
    %110 = math.rsqrt %109 : vector<8x1xf32>
    %111 = vector.broadcast %110 : vector<8x1xf32> to vector<8x128xf32>
    %112 = arith.mulf %102, %111 : vector<8x128xf32>
    %113 = vector.broadcast %94 : vector<1x128xf32> to vector<8x128xf32>
    %114 = arith.mulf %112, %113 : vector<8x128xf32>
    %115 = vector.broadcast %96 : vector<1x128xf32> to vector<8x128xf32>
    %116 = arith.addf %114, %115 : vector<8x128xf32>
    %c0_57 = arith.constant 0 : index
    %c0_58 = arith.constant 0 : index
    %117 = vector.load %arg20[%c0_57, %c0_58] : memref<8x128xf32, #tpu.memory_space<vmem>>, vector<8x128xf32>
    tpu.vector_store %arg20[%c0_57, %c0_58], %116 {strides = array<i32>} : memref<8x128xf32, #tpu.memory_space<vmem>>, vector<8x128xf32>,
    %c1_i32 = arith.constant 1 : i32
    %118 = arith.cmpi eq, %arg1, %c1_i32 : i32
    %119 = arith.extui %118 : i1 to i32
    %c0_i32_59 = arith.constant 0 : i32
    %120 = arith.cmpi ne, %119, %c0_i32_59 : i32
    scf.if %120 {
      %c0_60 = arith.constant 0 : index
      %c0_61 = arith.constant 0 : index
      %121 = vector.load %arg17[%c0_60, %c0_61] : memref<1x128xbf16, #tpu.memory_space<vmem>>, vector<1x128xbf16>
      %122 = arith.truncf %116 : vector<8x128xf32> to vector<8x128xbf16>
      %cst_62 = arith.constant dense<0.000000e+00> : vector<1x8xf32>
      %123 = tpu.matmul %121, %122, %cst_62 {dimension_numbers = #tpu.dot_dimension_numbers<[1], [1], [0], [0], [0, 0, 1, 0], [], []>} : vector<1x128xbf16>, vector<8x128xbf16>, vector<1x8xf32> -> vector<1x8xf32>
      %c0_63 = arith.constant 0 : index
      %c0_64 = arith.constant 0 : index
      %124 = vector.load %arg18[%c0_63, %c0_64] : memref<1x1xf32, #tpu.memory_space<vmem>>, vector<1x1xf32>
      %125 = vector.broadcast %124 : vector<1x1xf32> to vector<1x8xf32>
      %126 = arith.addf %123, %125 : vector<1x8xf32>
      %cst_65 = arith.constant dense<0xFF800000> : vector<1xf32>
      %127 = vector.multi_reduction <maximumf>, %126, %cst_65 [1] : vector<1x8xf32> to vector<1xf32>
      %128 = vector.shape_cast %127 : vector<1xf32> to vector<1x1xf32>
      %129 = vector.broadcast %128 : vector<1x1xf32> to vector<1x8xf32>
      %130 = arith.subf %126, %129 : vector<1x8xf32>
      %131 = math.exp %130 : vector<1x8xf32>
      %cst_66 = arith.constant dense<0.000000e+00> : vector<1xf32>
      %132 = vector.multi_reduction <add>, %131, %cst_66 [1] : vector<1x8xf32> to vector<1xf32>
      %133 = vector.shape_cast %132 : vector<1xf32> to vector<1x1xf32>
      %134 = vector.broadcast %133 : vector<1x1xf32> to vector<1x8xf32>
      %135 = arith.divf %131, %134 : vector<1x8xf32>
      %c0_67 = arith.constant 0 : index
      %c0_68 = arith.constant 0 : index
      %c0_69 = arith.constant 0 : index
      %136 = vector.load %arg19[%c0_67, %c0_68, %c0_69] : memref<1x1x8xf32, #tpu.memory_space<vmem>>, vector<1x1x8xf32>
      %137 = vector.shape_cast %136 : vector<1x1x8xf32> to vector<1x8xf32>
      %138 = vector.shape_cast %135 : vector<1x8xf32> to vector<1x1x8xf32>
      tpu.vector_store %arg19[%c0_67, %c0_68, %c0_69], %138 {strides = array<i32>} : memref<1x1x8xf32, #tpu.memory_space<vmem>>, vector<1x1x8xf32>,
    } else {
    }
    return
  }
  func.func @transform_0(%arg0: i32, %arg1: i32) -> (i32, i32, i32) {
    %c0_i32 = arith.constant 0 : i32
    %c0_i32_0 = arith.constant 0 : i32
    %c0_i32_1 = arith.constant 0 : i32
    return %arg0, %c0_i32, %c0_i32_0 : i32, i32, i32
  }
  func.func @transform_1(%arg0: i32, %arg1: i32) -> (i32, i32) {
    %c0_i32 = arith.constant 0 : i32
    %c0_i32_0 = arith.constant 0 : i32
    %c0_i32_1 = arith.constant 0 : i32
    return %c0_i32, %c0_i32_0 : i32, i32
  }
  func.func @transform_2(%arg0: i32, %arg1: i32) -> (i32, i32) {
    %c0_i32 = arith.constant 0 : i32
    %c0_i32_0 = arith.constant 0 : i32
    %c0_i32_1 = arith.constant 0 : i32
    return %c0_i32, %c0_i32_0 : i32, i32
  }
  func.func @transform_3(%arg0: i32, %arg1: i32) -> (i32, i32, i32) {
    %c0_i32 = arith.constant 0 : i32
    %c0_i32_0 = arith.constant 0 : i32
    %c0_i32_1 = arith.constant 0 : i32
    return %arg1, %c0_i32, %c0_i32_0 : i32, i32, i32
  }
  func.func @transform_4(%arg0: i32, %arg1: i32) -> (i32, i32, i32) {
    %c0_i32 = arith.constant 0 : i32
    %c0_i32_0 = arith.constant 0 : i32
    %c0_i32_1 = arith.constant 0 : i32
    return %arg1, %c0_i32, %c0_i32_0 : i32, i32, i32
  }
  func.func @transform_5(%arg0: i32, %arg1: i32) -> (i32, i32, i32) {
    %c0_i32 = arith.constant 0 : i32
    %c0_i32_0 = arith.constant 0 : i32
    %c0_i32_1 = arith.constant 0 : i32
    return %arg1, %c0_i32, %c0_i32_0 : i32, i32, i32
  }
  func.func @transform_6(%arg0: i32, %arg1: i32) -> (i32, i32, i32) {
    %c0_i32 = arith.constant 0 : i32
    %c0_i32_0 = arith.constant 0 : i32
    %c0_i32_1 = arith.constant 0 : i32
    return %arg1, %c0_i32, %c0_i32_0 : i32, i32, i32
  }
  func.func @transform_7(%arg0: i32, %arg1: i32) -> (i32, i32, i32) {
    %c0_i32 = arith.constant 0 : i32
    %c0_i32_0 = arith.constant 0 : i32
    %c0_i32_1 = arith.constant 0 : i32
    return %arg1, %c0_i32, %c0_i32_0 : i32, i32, i32
  }
  func.func @transform_8(%arg0: i32, %arg1: i32) -> (i32, i32, i32) {
    %c0_i32 = arith.constant 0 : i32
    %c0_i32_0 = arith.constant 0 : i32
    %c0_i32_1 = arith.constant 0 : i32
    return %arg1, %c0_i32, %c0_i32_0 : i32, i32, i32
  }
  func.func @transform_9(%arg0: i32, %arg1: i32) -> (i32, i32, i32) {
    %c0_i32 = arith.constant 0 : i32
    %c0_i32_0 = arith.constant 0 : i32
    %c0_i32_1 = arith.constant 0 : i32
    return %arg1, %c0_i32, %c0_i32_0 : i32, i32, i32
  }
  func.func @transform_10(%arg0: i32, %arg1: i32) -> (i32, i32, i32) {
    %c0_i32 = arith.constant 0 : i32
    %c0_i32_0 = arith.constant 0 : i32
    %c0_i32_1 = arith.constant 0 : i32
    return %arg1, %c0_i32, %c0_i32_0 : i32, i32, i32
  }
  func.func @transform_11(%arg0: i32, %arg1: i32) -> (i32, i32, i32) {
    %c0_i32 = arith.constant 0 : i32
    %c0_i32_0 = arith.constant 0 : i32
    %c0_i32_1 = arith.constant 0 : i32
    return %arg1, %c0_i32, %c0_i32_0 : i32, i32, i32
  }
  func.func @transform_12(%arg0: i32, %arg1: i32) -> (i32, i32, i32) {
    %c0_i32 = arith.constant 0 : i32
    %c0_i32_0 = arith.constant 0 : i32
    %c0_i32_1 = arith.constant 0 : i32
    return %arg1, %c0_i32, %c0_i32_0 : i32, i32, i32
  }
  func.func @transform_13(%arg0: i32, %arg1: i32) -> (i32, i32, i32) {
    %c0_i32 = arith.constant 0 : i32
    %c0_i32_0 = arith.constant 0 : i32
    %c0_i32_1 = arith.constant 0 : i32
    return %arg1, %c0_i32, %c0_i32_0 : i32, i32, i32
  }
  func.func @transform_14(%arg0: i32, %arg1: i32) -> (i32, i32, i32) {
    %c0_i32 = arith.constant 0 : i32
    %c0_i32_0 = arith.constant 0 : i32
    %c0_i32_1 = arith.constant 0 : i32
    return %arg1, %c0_i32, %c0_i32_0 : i32, i32, i32
  }
  func.func @transform_15(%arg0: i32, %arg1: i32) -> (i32, i32) {
    %c0_i32 = arith.constant 0 : i32
    %c0_i32_0 = arith.constant 0 : i32
    %c0_i32_1 = arith.constant 0 : i32
    return %c0_i32, %c0_i32_0 : i32, i32
  }
  func.func @transform_16(%arg0: i32, %arg1: i32) -> (i32, i32) {
    %c0_i32 = arith.constant 0 : i32
    %c0_i32_0 = arith.constant 0 : i32
    %c0_i32_1 = arith.constant 0 : i32
    return %c0_i32, %c0_i32_0 : i32, i32
  }
  func.func @transform_17(%arg0: i32, %arg1: i32) -> (i32, i32, i32) {
    %c0_i32 = arith.constant 0 : i32
    %c0_i32_0 = arith.constant 0 : i32
    %c0_i32_1 = arith.constant 0 : i32
    return %arg0, %c0_i32, %c0_i32_0 : i32, i32, i32
  }
}

</mosaic_0001>

<llo_original>
// kernel: tpu_custom_call.1
$region0: #{tpu_custom_call.1}
  #allocation0 [shape = 'u32[]', space=smem, size = 0x4, offset = 0x4, fixed_abs, tag = 'smem constant byte address 0x4 - core index']
  #allocation1 [shape = 'u32[144,128]{1,0:T(1,128)}', space=vmem, size = 0x12000, scoped, tag = 'internal scratch']
  #allocation2 [shape = 'f32[8,128]{1,0:T(8,128)}', space=vmem, size = 0x1000, scoped, tag = 'scratch operand']
  #allocation3 [shape = 'f32[1,1]{1,0:T(1,128)S(1)}', space=vmem, size = 0x200, scoped, tag = 'scoped memory for tpu_custom_call.1']
  %s0 = inlined_call_operand.hbm [shape: f32[2,8,128], index: 0, kind: input, shape index: {}]
  %s1 = inlined_call_operand.hbm [shape: bf16[128,128], index: 1, kind: input, shape index: {}]
  %s2 = inlined_call_operand.hbm [shape: f32[1,128], index: 2, kind: input, shape index: {}]
  %s3 = inlined_call_operand.hbm [shape: bf16[2,128,384], index: 3, kind: input, shape index: {}]
  %s4 = inlined_call_operand.vmem [shape: f32[2,1,384], index: 4, kind: input, shape index: {}]
  %s5 = inlined_call_operand.hbm [shape: bf16[2,128,128], index: 5, kind: input, shape index: {}]
  %s6 = inlined_call_operand.vmem [shape: f32[2,1,128], index: 6, kind: input, shape index: {}]
  %s7 = inlined_call_operand.vmem [shape: f32[2,1,128], index: 7, kind: input, shape index: {}]
  %s8 = inlined_call_operand.vmem [shape: f32[2,1,128], index: 8, kind: input, shape index: {}]
  %s9 = inlined_call_operand.hbm [shape: bf16[2,128,128], index: 9, kind: input, shape index: {}]
  %s10 = inlined_call_operand.vmem [shape: f32[2,1,128], index: 10, kind: input, shape index: {}]
  %s11 = inlined_call_operand.hbm [shape: bf16[2,128,128], index: 11, kind: input, shape index: {}]
  %s12 = inlined_call_operand.vmem [shape: f32[2,1,128], index: 12, kind: input, shape index: {}]
  %s13 = inlined_call_operand.vmem [shape: f32[2,1,128], index: 13, kind: input, shape index: {}]
  %s14 = inlined_call_operand.vmem [shape: f32[2,1,128], index: 14, kind: input, shape index: {}]
  %s15 = inlined_call_operand.vmem [shape: bf16[1,128], index: 15, kind: input, shape index: {}]
  %s16 = inlined_call_operand.<no memory space> [shape: f32[1,1], index: 16, kind: input, shape index: {}]
  %s17 = inlined_call_operand.hbm [shape: f32[2,1,8], index: 17, kind: output, shape index: {}]
  %s18 = sld [smem:[#allocation0]]
  $region137: #{tpu_custom_call.1} parent=0
    _
  %s20 = ssub.s32 1, %s18
  %s21 = scalar_select 0, %s20, %s18
  %v22 = vstv %s16
  %23 = vst [vmem:[#allocation3] sm:$0x1] %v22
  $region1: #{tpu_custom_call.1} parent=0
    #allocation4 [shape = 'u8[8192]{0}', space=vmem, size = 0x2000, scoped, tag = 'input window, operand 0']
    #allocation5 [shape = 's32[2]{0}', space=sflag, size = 0x8, scoped, tag = 'scoped memory for tpu_custom_call.1']
    #allocation6 [shape = 's32[2]{0}', space=sflag, size = 0x8, scoped, tag = 'scoped memory for tpu_custom_call.1']
    #allocation7 [shape = 'u8[32768]{0}', space=vmem, size = 0x8000, scoped, tag = 'input window, operand 1, single buffered']
    #allocation8 [shape = 's32[1]{0}', space=sflag, size = 0x4, scoped, tag = 'scoped memory for tpu_custom_call.1']
    #allocation9 [shape = 'u8[512]{0}', space=vmem, size = 0x400, scoped, tag = 'input window, operand 2, single buffered']
    #allocation10 [shape = 'u8[196608]{0}', space=vmem, size = 0x30000, scoped, tag = 'input window, operand 3']
    #allocation11 [shape = 's32[2]{0}', space=sflag, size = 0x8, scoped, tag = 'scoped memory for tpu_custom_call.1']
    #allocation12 [shape = 'u8[65536]{0}', space=vmem, size = 0x10000, scoped, tag = 'input window, operand 5']
    #allocation13 [shape = 'u8[65536]{0}', space=vmem, size = 0x10000, scoped, tag = 'input window, operand 9']
    #allocation14 [shape = 's32[2]{0}', space=sflag, size = 0x8, scoped, tag = 'scoped memory for tpu_custom_call.1']
    #allocation15 [shape = 'u8[65536]{0}', space=vmem, size = 0x10000, scoped, tag = 'input window, operand 11']
    #allocation16 [shape = 'u8[1024]{0}', space=vmem, size = 0x400, scoped, tag = 'output window, operand 0']
    %24 = vsyncpa [#allocation5], 0
    %s25 = scalar_lea.sflag [#allocation5], 1
    %26 = vsyncpa %s25, 0
    %27 = vsyncpa [#allocation8], 0
    %28 = vsyncpa [#allocation11], 0
    %s29 = scalar_lea.sflag [#allocation11], 1
    %30 = vsyncpa %s29, 0
    %31 = vsyncpa [#allocation14], 0
    %s32 = scalar_lea.sflag [#allocation14], 1
    %33 = vsyncpa %s32, 0
    %34 = vsyncpa [#allocation6], 0
    %s35 = scalar_lea.sflag [#allocation6], 1
    %36 = vsyncpa %s35, 0
    loop: start=0, step=1, limit=6
    $region2: #{tpu_custom_call.1} parent=1 // loop_pre_header
      _
    $region3: #{tpu_custom_call.1} parent=1 // loop_header
      %s38 = sphi 0, %s42
      %p39 = scmp.ge.s32.totalorder %s38, 6
      %s45 = sphi 0, %s57
      %s46 = sphi 0, %s53
      %s47 = sphi 0, %s45
      %s48 = sphi 0, %s46
      %s49 = sphi 0, %s47
      %s50 = sphi 0, %s48
      %s60 = sphi 0, %s62
      %s63 = sphi 0, %s60
      %s64 = sphi 0, %s63
      %s80 = sphi 0, %s64
      %s84 = sphi 0, %s84
      %s86 = sphi 0, %s84
      %s87 = sphi 0, %s86
      %s101 = sphi 0, %s87
      %s105 = sphi 0, %s105
      %s107 = sphi 0, %s105
      %s108 = sphi 0, %s107
      %s122 = sphi 0, %s108
      %s128 = sphi 0, %s130
      %s131 = sphi 0, %s128
      %s132 = sphi 0, %s131
      %s148 = sphi 0, %s132
      %s154 = sphi 0, %s156
      %s157 = sphi 0, %s154
      %s158 = sphi 0, %s157
      %s174 = sphi 0, %s158
      %s180 = sphi 0, %s182
      %s183 = sphi 0, %s180
      %s184 = sphi 0, %s183
      %s200 = sphi 0, %s184
      %s206 = sphi 0, %s208
      %s209 = sphi 0, %s206
      %s210 = sphi 0, %s209
      %s226 = sphi 0, %s210
      %s232 = sphi 0, %s234
      %s235 = sphi 0, %s232
      %s236 = sphi 0, %s235
      %s252 = sphi 0, %s236
      %s258 = sphi 0, %s260
      %s261 = sphi 0, %s258
      %s262 = sphi 0, %s261
      %s278 = sphi 0, %s262
      %s284 = sphi 0, %s286
      %s287 = sphi 0, %s284
      %s288 = sphi 0, %s287
      %s304 = sphi 0, %s288
      %s310 = sphi 0, %s312
      %s313 = sphi 0, %s310
      %s314 = sphi 0, %s313
      %s330 = sphi 0, %s314
      %s336 = sphi 0, %s338
      %s339 = sphi 0, %s336
      %s340 = sphi 0, %s339
      %s356 = sphi 0, %s340
      %s362 = sphi 0, %s364
      %s365 = sphi 0, %s362
      %s366 = sphi 0, %s365
      %s382 = sphi 0, %s366
      %s388 = sphi 0, %s390
      %s391 = sphi 0, %s388
      %s392 = sphi 0, %s391
      %s408 = sphi 0, %s392
      %s414 = sphi 0, %s416
      %s417 = sphi 0, %s414
      %s418 = sphi 0, %s417
      %s434 = sphi 0, %s418
      %s438 = sphi 0, %s438
      %s440 = sphi 0, %s438
      %s441 = sphi 0, %s440
      %s455 = sphi 0, %s441
      %s459 = sphi 0, %s459
      %s461 = sphi 0, %s459
      %s462 = sphi 0, %s461
      %s476 = sphi 0, %s462
      %s482 = sphi 0, %s484
      %s485 = sphi 0, %s482
      %s486 = sphi 0, %s485
      %s502 = sphi 0, %s486
    $region4: #{tpu_custom_call.1} parent=1 // loop_header_branch
      %41 = sbr.rel (%p39) target = $region8
    $region5: #{tpu_custom_call.1} parent=1 // loop_body
      %s43 = ssub.s32 %s38, 1
      %s44 = ssub.s32 %s38, 2
      %s51 = sadd.s32 1, %s46
      %p52 = scmp.ge.s32.totalorder %s51, 2
      %s53 = scalar_select %p52, 0, %s51
      %s54 = sadd.s32 1, %s45
      %s55 = scalar_select %p52, %s54, %s45
      %p56 = scmp.ge.s32.totalorder %s55, 2
      %s57 = scalar_select %p56, 0, %s55
      %s58 = ssub.s32 %s45, %s57
      %p59 = scmp.eq.s32.totalorder %s58, 0
      %s61 = sadd.s32 %s60, 1
      %s62 = scalar_select %p59, %s60, %s61
      %p65 = pneg %p59
      %p66 = scmp.eq.s32.totalorder %s38, 3
      %p67 = por %p65, %p66
      %p68 = scmp.ne.s32.totalorder %s60, %s63
      %p69 = scmp.eq.s32.totalorder %s38, 0
      %p70 = por %p68, %p69
      %p71 = scmp.ne.s32.totalorder %s60, %s63
      %p72 = scmp.eq.s32.totalorder %s43, 3
      %p73 = por %p71, %p72
      %p74 = scmp.ne.s32.totalorder %s63, %s64
      %p75 = scmp.eq.s32.totalorder %s43, 0
      %p76 = por %p74, %p75
      %p77 = scmp.ne.s32.totalorder %s63, %s64
      %p78 = scmp.eq.s32.totalorder %s44, 3
      %p79 = por %p77, %p78
      %p81 = scmp.ne.s32.totalorder %s64, %s80
      %p82 = scmp.eq.s32.totalorder %s44, 0
      %p83 = por %p81, %p82
      %s85 = sadd.s32 %s84, 1
      %p88 = scmp.eq.s32.totalorder %s38, 3
      %p89 = scmp.ne.s32.totalorder %s84, %s86
      %p90 = scmp.eq.s32.totalorder %s38, 0
      %p91 = por %p89, %p90
      %p92 = scmp.ne.s32.totalorder %s84, %s86
      %p93 = scmp.eq.s32.totalorder %s43, 3
      %p94 = por %p92, %p93
      %p95 = scmp.ne.s32.totalorder %s86, %s87
      %p96 = scmp.eq.s32.totalorder %s43, 0
      %p97 = por %p95, %p96
      %p98 = scmp.ne.s32.totalorder %s86, %s87
      %p99 = scmp.eq.s32.totalorder %s44, 3
      %p100 = por %p98, %p99
      %p102 = scmp.ne.s32.totalorder %s87, %s101
      %p103 = scmp.eq.s32.totalorder %s44, 0
      %p104 = por %p102, %p103
      %s106 = sadd.s32 %s105, 1
      %p109 = scmp.eq.s32.totalorder %s38, 3
      %p110 = scmp.ne.s32.totalorder %s105, %s107
      %p111 = scmp.eq.s32.totalorder %s38, 0
      %p112 = por %p110, %p111
      %p113 = scmp.ne.s32.totalorder %s105, %s107
      %p114 = scmp.eq.s32.totalorder %s43, 3
      %p115 = por %p113, %p114
      %p116 = scmp.ne.s32.totalorder %s107, %s108
      %p117 = scmp.eq.s32.totalorder %s43, 0
      %p118 = por %p116, %p117
      %p119 = scmp.ne.s32.totalorder %s107, %s108
      %p120 = scmp.eq.s32.totalorder %s44, 3
      %p121 = por %p119, %p120
      %p123 = scmp.ne.s32.totalorder %s108, %s122
      %p124 = scmp.eq.s32.totalorder %s44, 0
      %p125 = por %p123, %p124
      %s126 = ssub.s32 %s46, %s53
      %p127 = scmp.eq.s32.totalorder %s126, 0
      %s129 = sadd.s32 %s128, 1
      %s130 = scalar_select %p127, %s128, %s129
      %p133 = pneg %p127
      %p134 = scmp.eq.s32.totalorder %s38, 3
      %p135 = por %p133, %p134
      %p136 = scmp.ne.s32.totalorder %s128, %s131
      %p137 = scmp.eq.s32.totalorder %s38, 0
      %p138 = por %p136, %p137
      %p139 = scmp.ne.s32.totalorder %s128, %s131
      %p140 = scmp.eq.s32.totalorder %s43, 3
      %p141 = por %p139, %p140
      %p142 = scmp.ne.s32.totalorder %s131, %s132
      %p143 = scmp.eq.s32.totalorder %s43, 0
      %p144 = por %p142, %p143
      %p145 = scmp.ne.s32.totalorder %s131, %s132
      %p146 = scmp.eq.s32.totalorder %s44, 3
      %p147 = por %p145, %p146
      %p149 = scmp.ne.s32.totalorder %s132, %s148
      %p150 = scmp.eq.s32.totalorder %s44, 0
      %p151 = por %p149, %p150
      %s152 = ssub.s32 %s46, %s53
      %p153 = scmp.eq.s32.totalorder %s152, 0
      %s155 = sadd.s32 %s154, 1
      %s156 = scalar_select %p153, %s154, %s155
      %p159 = pneg %p153
      %p160 = scmp.eq.s32.totalorder %s38, 3
      %p161 = por %p159, %p160
      %p162 = scmp.ne.s32.totalorder %s154, %s157
      %p163 = scmp.eq.s32.totalorder %s38, 0
      %p164 = por %p162, %p163
      %p165 = scmp.ne.s32.totalorder %s154, %s157
      %p166 = scmp.eq.s32.totalorder %s43, 3
      %p167 = por %p165, %p166
      %p168 = scmp.ne.s32.totalorder %s157, %s158
      %p169 = scmp.eq.s32.totalorder %s43, 0
      %p170 = por %p168, %p169
      %p171 = scmp.ne.s32.totalorder %s157, %s158
      %p172 = scmp.eq.s32.totalorder %s44, 3
      %p173 = por %p171, %p172
      %p175 = scmp.ne.s32.totalorder %s158, %s174
      %p176 = scmp.eq.s32.totalorder %s44, 0
      %p177 = por %p175, %p176
      %s178 = ssub.s32 %s46, %s53
      %p179 = scmp.eq.s32.totalorder %s178, 0
      %s181 = sadd.s32 %s180, 1
      %s182 = scalar_select %p179, %s180, %s181
      %p185 = pneg %p179
      %p186 = scmp.eq.s32.totalorder %s38, 3
      %p187 = por %p185, %p186
      %p188 = scmp.ne.s32.totalorder %s180, %s183
      %p189 = scmp.eq.s32.totalorder %s38, 0
      %p190 = por %p188, %p189
      %p191 = scmp.ne.s32.totalorder %s180, %s183
      %p192 = scmp.eq.s32.totalorder %s43, 3
      %p193 = por %p191, %p192
      %p194 = scmp.ne.s32.totalorder %s183, %s184
      %p195 = scmp.eq.s32.totalorder %s43, 0
      %p196 = por %p194, %p195
      %p197 = scmp.ne.s32.totalorder %s183, %s184
      %p198 = scmp.eq.s32.totalorder %s44, 3
      %p199 = por %p197, %p198
      %p201 = scmp.ne.s32.totalorder %s184, %s200
      %p202 = scmp.eq.s32.totalorder %s44, 0
      %p203 = por %p201, %p202
      %s204 = ssub.s32 %s46, %s53
      %p205 = scmp.eq.s32.totalorder %s204, 0
      %s207 = sadd.s32 %s206, 1
      %s208 = scalar_select %p205, %s206, %s207
      %p211 = pneg %p205
      %p212 = scmp.eq.s32.totalorder %s38, 3
      %p213 = por %p211, %p212
      %p214 = scmp.ne.s32.totalorder %s206, %s209
      %p215 = scmp.eq.s32.totalorder %s38, 0
      %p216 = por %p214, %p215
      %p217 = scmp.ne.s32.totalorder %s206, %s209
      %p218 = scmp.eq.s32.totalorder %s43, 3
      %p219 = por %p217, %p218
      %p220 = scmp.ne.s32.totalorder %s209, %s210
      %p221 = scmp.eq.s32.totalorder %s43, 0
      %p222 = por %p220, %p221
      %p223 = scmp.ne.s32.totalorder %s209, %s210
      %p224 = scmp.eq.s32.totalorder %s44, 3
      %p225 = por %p223, %p224
      %p227 = scmp.ne.s32.totalorder %s210, %s226
      %p228 = scmp.eq.s32.totalorder %s44, 0
      %p229 = por %p227, %p228
      %s230 = ssub.s32 %s46, %s53
      %p231 = scmp.eq.s32.totalorder %s230, 0
      %s233 = sadd.s32 %s232, 1
      %s234 = scalar_select %p231, %s232, %s233
      %p237 = pneg %p231
      %p238 = scmp.eq.s32.totalorder %s38, 3
      %p239 = por %p237, %p238
      %p240 = scmp.ne.s32.totalorder %s232, %s235
      %p241 = scmp.eq.s32.totalorder %s38, 0
      %p242 = por %p240, %p241
      %p243 = scmp.ne.s32.totalorder %s232, %s235
      %p244 = scmp.eq.s32.totalorder %s43, 3
      %p245 = por %p243, %p244
      %p246 = scmp.ne.s32.totalorder %s235, %s236
      %p247 = scmp.eq.s32.totalorder %s43, 0
      %p248 = por %p246, %p247
      %p249 = scmp.ne.s32.totalorder %s235, %s236
      %p250 = scmp.eq.s32.totalorder %s44, 3
      %p251 = por %p249, %p250
      %p253 = scmp.ne.s32.totalorder %s236, %s252
      %p254 = scmp.eq.s32.totalorder %s44, 0
      %p255 = por %p253, %p254
      %s256 = ssub.s32 %s46, %s53
      %p257 = scmp.eq.s32.totalorder %s256, 0
      %s259 = sadd.s32 %s258, 1
      %s260 = scalar_select %p257, %s258, %s259
      %p263 = pneg %p257
      %p264 = scmp.eq.s32.totalorder %s38, 3
      %p265 = por %p263, %p264
      %p266 = scmp.ne.s32.totalorder %s258, %s261
      %p267 = scmp.eq.s32.totalorder %s38, 0
      %p268 = por %p266, %p267
      %p269 = scmp.ne.s32.totalorder %s258, %s261
      %p270 = scmp.eq.s32.totalorder %s43, 3
      %p271 = por %p269, %p270
      %p272 = scmp.ne.s32.totalorder %s261, %s262
      %p273 = scmp.eq.s32.totalorder %s43, 0
      %p274 = por %p272, %p273
      %p275 = scmp.ne.s32.totalorder %s261, %s262
      %p276 = scmp.eq.s32.totalorder %s44, 3
      %p277 = por %p275, %p276
      %p279 = scmp.ne.s32.totalorder %s262, %s278
      %p280 = scmp.eq.s32.totalorder %s44, 0
      %p281 = por %p279, %p280
      %s282 = ssub.s32 %s46, %s53
      %p283 = scmp.eq.s32.totalorder %s282, 0
      %s285 = sadd.s32 %s284, 1
      %s286 = scalar_select %p283, %s284, %s285
      %p289 = pneg %p283
      %p290 = scmp.eq.s32.totalorder %s38, 3
      %p291 = por %p289, %p290
      %p292 = scmp.ne.s32.totalorder %s284, %s287
      %p293 = scmp.eq.s32.totalorder %s38, 0
      %p294 = por %p292, %p293
      %p295 = scmp.ne.s32.totalorder %s284, %s287
      %p296 = scmp.eq.s32.totalorder %s43, 3
      %p297 = por %p295, %p296
      %p298 = scmp.ne.s32.totalorder %s287, %s288
      %p299 = scmp.eq.s32.totalorder %s43, 0
      %p300 = por %p298, %p299
      %p301 = scmp.ne.s32.totalorder %s287, %s288
      %p302 = scmp.eq.s32.totalorder %s44, 3
      %p303 = por %p301, %p302
      %p305 = scmp.ne.s32.totalorder %s288, %s304
      %p306 = scmp.eq.s32.totalorder %s44, 0
      %p307 = por %p305, %p306
      %s308 = ssub.s32 %s46, %s53
      %p309 = scmp.eq.s32.totalorder %s308, 0
      %s311 = sadd.s32 %s310, 1
      %s312 = scalar_select %p309, %s310, %s311
      %p315 = pneg %p309
      %p316 = scmp.eq.s32.totalorder %s38, 3
      %p317 = por %p315, %p316
      %p318 = scmp.ne.s32.totalorder %s310, %s313
      %p319 = scmp.eq.s32.totalorder %s38, 0
      %p320 = por %p318, %p319
      %p321 = scmp.ne.s32.totalorder %s310, %s313
      %p322 = scmp.eq.s32.totalorder %s43, 3
      %p323 = por %p321, %p322
      %p324 = scmp.ne.s32.totalorder %s313, %s314
      %p325 = scmp.eq.s32.totalorder %s43, 0
      %p326 = por %p324, %p325
      %p327 = scmp.ne.s32.totalorder %s313, %s314
      %p328 = scmp.eq.s32.totalorder %s44, 3
      %p329 = por %p327, %p328
      %p331 = scmp.ne.s32.totalorder %s314, %s330
      %p332 = scmp.eq.s32.totalorder %s44, 0
      %p333 = por %p331, %p332
      %s334 = ssub.s32 %s46, %s53
      %p335 = scmp.eq.s32.totalorder %s334, 0
      %s337 = sadd.s32 %s336, 1
      %s338 = scalar_select %p335, %s336, %s337
      %p341 = pneg %p335
      %p342 = scmp.eq.s32.totalorder %s38, 3
      %p343 = por %p341, %p342
      %p344 = scmp.ne.s32.totalorder %s336, %s339
      %p345 = scmp.eq.s32.totalorder %s38, 0
      %p346 = por %p344, %p345
      %p347 = scmp.ne.s32.totalorder %s336, %s339
      %p348 = scmp.eq.s32.totalorder %s43, 3
      %p349 = por %p347, %p348
      %p350 = scmp.ne.s32.totalorder %s339, %s340
      %p351 = scmp.eq.s32.totalorder %s43, 0
      %p352 = por %p350, %p351
      %p353 = scmp.ne.s32.totalorder %s339, %s340
      %p354 = scmp.eq.s32.totalorder %s44, 3
      %p355 = por %p353, %p354
      %p357 = scmp.ne.s32.totalorder %s340, %s356
      %p358 = scmp.eq.s32.totalorder %s44, 0
      %p359 = por %p357, %p358
      %s360 = ssub.s32 %s46, %s53
      %p361 = scmp.eq.s32.totalorder %s360, 0
      %s363 = sadd.s32 %s362, 1
      %s364 = scalar_select %p361, %s362, %s363
      %p367 = pneg %p361
      %p368 = scmp.eq.s32.totalorder %s38, 3
      %p369 = por %p367, %p368
      %p370 = scmp.ne.s32.totalorder %s362, %s365
      %p371 = scmp.eq.s32.totalorder %s38, 0
      %p372 = por %p370, %p371
      %p373 = scmp.ne.s32.totalorder %s362, %s365
      %p374 = scmp.eq.s32.totalorder %s43, 3
      %p375 = por %p373, %p374
      %p376 = scmp.ne.s32.totalorder %s365, %s366
      %p377 = scmp.eq.s32.totalorder %s43, 0
      %p378 = por %p376, %p377
      %p379 = scmp.ne.s32.totalorder %s365, %s366
      %p380 = scmp.eq.s32.totalorder %s44, 3
      %p381 = por %p379, %p380
      %p383 = scmp.ne.s32.totalorder %s366, %s382
      %p384 = scmp.eq.s32.totalorder %s44, 0
      %p385 = por %p383, %p384
      %s386 = ssub.s32 %s46, %s53
      %p387 = scmp.eq.s32.totalorder %s386, 0
      %s389 = sadd.s32 %s388, 1
      %s390 = scalar_select %p387, %s388, %s389
      %p393 = pneg %p387
      %p394 = scmp.eq.s32.totalorder %s38, 3
      %p395 = por %p393, %p394
      %p396 = scmp.ne.s32.totalorder %s388, %s391
      %p397 = scmp.eq.s32.totalorder %s38, 0
      %p398 = por %p396, %p397
      %p399 = scmp.ne.s32.totalorder %s388, %s391
      %p400 = scmp.eq.s32.totalorder %s43, 3
      %p401 = por %p399, %p400
      %p402 = scmp.ne.s32.totalorder %s391, %s392
      %p403 = scmp.eq.s32.totalorder %s43, 0
      %p404 = por %p402, %p403
      %p405 = scmp.ne.s32.totalorder %s391, %s392
      %p406 = scmp.eq.s32.totalorder %s44, 3
      %p407 = por %p405, %p406
      %p409 = scmp.ne.s32.totalorder %s392, %s408
      %p410 = scmp.eq.s32.totalorder %s44, 0
      %p411 = por %p409, %p410
      %s412 = ssub.s32 %s46, %s53
      %p413 = scmp.eq.s32.totalorder %s412, 0
      %s415 = sadd.s32 %s414, 1
      %s416 = scalar_select %p413, %s414, %s415
      %p419 = pneg %p413
      %p420 = scmp.eq.s32.totalorder %s38, 3
      %p421 = por %p419, %p420
      %p422 = scmp.ne.s32.totalorder %s414, %s417
      %p423 = scmp.eq.s32.totalorder %s38, 0
      %p424 = por %p422, %p423
      %p425 = scmp.ne.s32.totalorder %s414, %s417
      %p426 = scmp.eq.s32.totalorder %s43, 3
      %p427 = por %p425, %p426
      %p428 = scmp.ne.s32.totalorder %s417, %s418
      %p429 = scmp.eq.s32.totalorder %s43, 0
      %p430 = por %p428, %p429
      %p431 = scmp.ne.s32.totalorder %s417, %s418
      %p432 = scmp.eq.s32.totalorder %s44, 3
      %p433 = por %p431, %p432
      %p435 = scmp.ne.s32.totalorder %s418, %s434
      %p436 = scmp.eq.s32.totalorder %s44, 0
      %p437 = por %p435, %p436
      %s439 = sadd.s32 %s438, 1
      %p442 = scmp.eq.s32.totalorder %s38, 3
      %p443 = scmp.ne.s32.totalorder %s438, %s440
      %p444 = scmp.eq.s32.totalorder %s38, 0
      %p445 = por %p443, %p444
      %p446 = scmp.ne.s32.totalorder %s438, %s440
      %p447 = scmp.eq.s32.totalorder %s43, 3
      %p448 = por %p446, %p447
      %p449 = scmp.ne.s32.totalorder %s440, %s441
      %p450 = scmp.eq.s32.totalorder %s43, 0
      %p451 = por %p449, %p450
      %p452 = scmp.ne.s32.totalorder %s440, %s441
      %p453 = scmp.eq.s32.totalorder %s44, 3
      %p454 = por %p452, %p453
      %p456 = scmp.ne.s32.totalorder %s441, %s455
      %p457 = scmp.eq.s32.totalorder %s44, 0
      %p458 = por %p456, %p457
      %s460 = sadd.s32 %s459, 1
      %p463 = scmp.eq.s32.totalorder %s38, 3
      %p464 = scmp.ne.s32.totalorder %s459, %s461
      %p465 = scmp.eq.s32.totalorder %s38, 0
      %p466 = por %p464, %p465
      %p467 = scmp.ne.s32.totalorder %s459, %s461
      %p468 = scmp.eq.s32.totalorder %s43, 3
      %p469 = por %p467, %p468
      %p470 = scmp.ne.s32.totalorder %s461, %s462
      %p471 = scmp.eq.s32.totalorder %s43, 0
      %p472 = por %p470, %p471
      %p473 = scmp.ne.s32.totalorder %s461, %s462
      %p474 = scmp.eq.s32.totalorder %s44, 3
      %p475 = por %p473, %p474
      %p477 = scmp.ne.s32.totalorder %s462, %s476
      %p478 = scmp.eq.s32.totalorder %s44, 0
      %p479 = por %p477, %p478
      %s480 = ssub.s32 %s45, %s57
      %p481 = scmp.eq.s32.totalorder %s480, 0
      %s483 = sadd.s32 %s482, 1
      %s484 = scalar_select %p481, %s482, %s483
      %p487 = pneg %p481
      %p488 = scmp.eq.s32.totalorder %s38, 3
      %p489 = por %p487, %p488
      %p490 = scmp.ne.s32.totalorder %s482, %s485
      %p491 = scmp.eq.s32.totalorder %s38, 0
      %p492 = por %p490, %p491
      %p493 = scmp.ne.s32.totalorder %s482, %s485
      %p494 = scmp.eq.s32.totalorder %s43, 3
      %p495 = por %p493, %p494
      %p496 = scmp.ne.s32.totalorder %s485, %s486
      %p497 = scmp.eq.s32.totalorder %s43, 0
      %p498 = por %p496, %p497
      %p499 = scmp.ne.s32.totalorder %s485, %s486
      %p500 = scmp.eq.s32.totalorder %s44, 3
      %p501 = por %p499, %p500
      %p503 = scmp.ne.s32.totalorder %s486, %s502
      %p504 = scmp.eq.s32.totalorder %s44, 0
      %p505 = por %p503, %p504
      %p506 = scmp.le.s32.totalorder 1, %s38
      %p507 = scmp.lt.s32.totalorder %s38, 5
      %p508 = pnand %p506, %p507
      %p509 = pneg %p508
      // Predicated region
      $region9: #{tpu_custom_call.1} parent=5 // pred_check
        _
      $region10: #{tpu_custom_call.1} parent=5 // pred_check_branch
        %511 = sbr.rel (%p508) target = $region12
      $region11: #{tpu_custom_call.1} parent=5 // pred_region
        %s512 = ssub.s32 %s38, 1
        // Predicated region
        $region13: #{tpu_custom_call.1} parent=11 // pred_check
          %p513 = pneg %p97
        $region14: #{tpu_custom_call.1} parent=11 // pred_check_branch
          %515 = sbr.rel (%p513) target = $region16
        $region15: #{tpu_custom_call.1} parent=11 // pred_region
          %s517 = ssub.s32 1024, 1024
          %518 = vsyncadd [#allocation8], %s517
          %s519 = sshll.u32 [#allocation7], 4
          %s520 = int_to_ptr.vmem [resolvable:$true] %s519
          %525 = dma.hbm_to_vmem [thread:$0]  %s1, 1024, %s520, [#allocation8], 64, 64, 4
        $region16: #{tpu_custom_call.1} parent=11 // pred_fallthru
          _
        // Predicated region
        $region17: #{tpu_custom_call.1} parent=11 // pred_check
          %p526 = pneg %p118
        $region18: #{tpu_custom_call.1} parent=11 // pred_check_branch
          %528 = sbr.rel (%p526) target = $region20
        $region19: #{tpu_custom_call.1} parent=11 // pred_region
          %s530 = ssub.s32 16, 16
          %531 = vsyncadd [#allocation8], %s530
          %s533 = sshll.u32 [#allocation9], 4
          %s534 = int_to_ptr.vmem [resolvable:$true] %s533
          %536 = dma.hbm_to_vmem [thread:$0]  %s2, 16, %s534, [#allocation8]
        $region20: #{tpu_custom_call.1} parent=11 // pred_fallthru
          _
        // Predicated region
        $region21: #{tpu_custom_call.1} parent=11 // pred_check
          %p537 = pneg %p451
        $region22: #{tpu_custom_call.1} parent=11 // pred_check_branch
          %539 = sbr.rel (%p537) target = $region24
        $region23: #{tpu_custom_call.1} parent=11 // pred_region
          _
        $region24: #{tpu_custom_call.1} parent=11 // pred_fallthru
          _
        // Predicated region
        $region25: #{tpu_custom_call.1} parent=11 // pred_check
          %p540 = pneg %p472
        $region26: #{tpu_custom_call.1} parent=11 // pred_check_branch
          %542 = sbr.rel (%p540) target = $region28
        $region27: #{tpu_custom_call.1} parent=11 // pred_region
          _
        $region28: #{tpu_custom_call.1} parent=11 // pred_fallthru
          _
      $region12: #{tpu_custom_call.1} parent=5 // pred_fallthru
        _
      %p543 = scmp.lt.s32.totalorder %s38, 4
      // Predicated region
      $region29: #{tpu_custom_call.1} parent=5 // pred_check
        %p544 = pneg %p543
      $region30: #{tpu_custom_call.1} parent=5 // pred_check_branch
        %546 = sbr.rel (%p544) target = $region32
      $region31: #{tpu_custom_call.1} parent=5 // pred_region
        // Predicated region
        $region33: #{tpu_custom_call.1} parent=31 // pred_check
          %p547 = pneg %p70
        $region34: #{tpu_custom_call.1} parent=31 // pred_check_branch
          %549 = sbr.rel (%p547) target = $region36
        $region35: #{tpu_custom_call.1} parent=31 // pred_region
          %s550 = sand.u32 %s60, 1
          %s551 = scalar_lea.sflag [#allocation5], %s550
          %s552 = sand.u32 %s60, 1
          %s553 = smul.addr %s552, 8
          %s554 = scalar_lea.vmem [#allocation4], %s553
          %s556 = ssub.s32 128, 128
          %557 = vsyncadd %s551, %s556
          %s558 = smul.addr %s45, 128
          %s559 = scalar_lea.hbm %s0, %s558
          %s561 = sshll.u32 %s554, 4
          %s562 = int_to_ptr.vmem [resolvable:$true] %s561
          %564 = dma.hbm_to_vmem [thread:$0]  %s559, 128, %s562, %s551
        $region36: #{tpu_custom_call.1} parent=31 // pred_fallthru
          _
        // Predicated region
        $region37: #{tpu_custom_call.1} parent=31 // pred_check
          %p565 = pneg %p138
        $region38: #{tpu_custom_call.1} parent=31 // pred_check_branch
          %567 = sbr.rel (%p565) target = $region40
        $region39: #{tpu_custom_call.1} parent=31 // pred_region
          %s568 = sand.u32 %s38, 1
          %s569 = scalar_lea.sflag [#allocation11], %s568
          %s570 = sand.u32 %s128, 1
          %s571 = smul.addr %s570, 192
          %s572 = scalar_lea.vmem [#allocation10], %s571
          %s574 = ssub.s32 3072, 3072
          %575 = vsyncadd %s569, %s574
          %s576 = smul.addr %s46, 48
          %s577 = smul.addr %s576, 64
          %s578 = scalar_lea.hbm %s3, %s577
          %s579 = sshll.u32 %s572, 4
          %s580 = int_to_ptr.vmem [resolvable:$true] %s579
          %585 = dma.hbm_to_vmem [thread:$0]  %s578, 3072, %s580, %s569, 192, 192, 12
        $region40: #{tpu_custom_call.1} parent=31 // pred_fallthru
          _
        // Predicated region
        $region41: #{tpu_custom_call.1} parent=31 // pred_check
          %p586 = pneg %p164
        $region42: #{tpu_custom_call.1} parent=31 // pred_check_branch
          %588 = sbr.rel (%p586) target = $region44
        $region43: #{tpu_custom_call.1} parent=31 // pred_region
          %p589 = scmp.lt.s32.totalorder %s46, 1
          %s590 = scalar_select %p589, %s46, 1
          %s591 = smul.addr %s590, 3
          %s592 = scalar_lea.vmem %s4, %s591
        $region44: #{tpu_custom_call.1} parent=31 // pred_fallthru
          _
        // Predicated region
        $region45: #{tpu_custom_call.1} parent=31 // pred_check
          %p593 = pneg %p190
        $region46: #{tpu_custom_call.1} parent=31 // pred_check_branch
          %595 = sbr.rel (%p593) target = $region48
        $region47: #{tpu_custom_call.1} parent=31 // pred_region
          %s596 = sand.u32 %s38, 1
          %s597 = scalar_lea.sflag [#allocation11], %s596
          %s598 = sand.u32 %s180, 1
          %s599 = smul.addr %s598, 64
          %s600 = scalar_lea.vmem [#allocation12], %s599
          %s602 = ssub.s32 1024, 1024
          %603 = vsyncadd %s597, %s602
          %s604 = smul.addr %s46, 16
          %s605 = smul.addr %s604, 64
          %s606 = scalar_lea.hbm %s5, %s605
          %s607 = sshll.u32 %s600, 4
          %s608 = int_to_ptr.vmem [resolvable:$true] %s607
          %613 = dma.hbm_to_vmem [thread:$0]  %s606, 1024, %s608, %s597, 64, 64, 4
        $region48: #{tpu_custom_call.1} parent=31 // pred_fallthru
          _
        // Predicated region
        $region49: #{tpu_custom_call.1} parent=31 // pred_check
          %p614 = pneg %p216
        $region50: #{tpu_custom_call.1} parent=31 // pred_check_branch
          %616 = sbr.rel (%p614) target = $region52
        $region51: #{tpu_custom_call.1} parent=31 // pred_region
          %p617 = scmp.lt.s32.totalorder %s46, 1
          %s618 = scalar_select %p617, %s46, 1
          %s619 = scalar_lea.vmem %s6, %s618
        $region52: #{tpu_custom_call.1} parent=31 // pred_fallthru
          _
        // Predicated region
        $region53: #{tpu_custom_call.1} parent=31 // pred_check
          %p620 = pneg %p242
        $region54: #{tpu_custom_call.1} parent=31 // pred_check_branch
          %622 = sbr.rel (%p620) target = $region56
        $region55: #{tpu_custom_call.1} parent=31 // pred_region
          %p623 = scmp.lt.s32.totalorder %s46, 1
          %s624 = scalar_select %p623, %s46, 1
          %s625 = scalar_lea.vmem %s7, %s624
        $region56: #{tpu_custom_call.1} parent=31 // pred_fallthru
          _
        // Predicated region
        $region57: #{tpu_custom_call.1} parent=31 // pred_check
          %p626 = pneg %p268
        $region58: #{tpu_custom_call.1} parent=31 // pred_check_branch
          %628 = sbr.rel (%p626) target = $region60
        $region59: #{tpu_custom_call.1} parent=31 // pred_region
          %p629 = scmp.lt.s32.totalorder %s46, 1
          %s630 = scalar_select %p629, %s46, 1
          %s631 = scalar_lea.vmem %s8, %s630
        $region60: #{tpu_custom_call.1} parent=31 // pred_fallthru
          _
        // Predicated region
        $region61: #{tpu_custom_call.1} parent=31 // pred_check
          %p632 = pneg %p294
        $region62: #{tpu_custom_call.1} parent=31 // pred_check_branch
          %634 = sbr.rel (%p632) target = $region64
        $region63: #{tpu_custom_call.1} parent=31 // pred_region
          %s635 = sand.u32 %s38, 1
          %s636 = scalar_lea.sflag [#allocation14], %s635
          %s637 = sand.u32 %s284, 1
          %s638 = smul.addr %s637, 64
          %s639 = scalar_lea.vmem [#allocation13], %s638
          %s641 = ssub.s32 1024, 1024
          %642 = vsyncadd %s636, %s641
          %s643 = smul.addr %s46, 16
          %s644 = smul.addr %s643, 64
          %s645 = scalar_lea.hbm %s9, %s644
          %s646 = sshll.u32 %s639, 4
          %s647 = int_to_ptr.vmem [resolvable:$true] %s646
          %652 = dma.hbm_to_vmem [thread:$0]  %s645, 1024, %s647, %s636, 64, 64, 4
        $region64: #{tpu_custom_call.1} parent=31 // pred_fallthru
          _
        // Predicated region
        $region65: #{tpu_custom_call.1} parent=31 // pred_check
          %p653 = pneg %p320
        $region66: #{tpu_custom_call.1} parent=31 // pred_check_branch
          %655 = sbr.rel (%p653) target = $region68
        $region67: #{tpu_custom_call.1} parent=31 // pred_region
          %p656 = scmp.lt.s32.totalorder %s46, 1
          %s657 = scalar_select %p656, %s46, 1
          %s658 = scalar_lea.vmem %s10, %s657
        $region68: #{tpu_custom_call.1} parent=31 // pred_fallthru
          _
        // Predicated region
        $region69: #{tpu_custom_call.1} parent=31 // pred_check
          %p659 = pneg %p346
        $region70: #{tpu_custom_call.1} parent=31 // pred_check_branch
          %661 = sbr.rel (%p659) target = $region72
        $region71: #{tpu_custom_call.1} parent=31 // pred_region
          %s662 = sand.u32 %s38, 1
          %s663 = scalar_lea.sflag [#allocation14], %s662
          %s664 = sand.u32 %s336, 1
          %s665 = smul.addr %s664, 64
          %s666 = scalar_lea.vmem [#allocation15], %s665
          %s668 = ssub.s32 1024, 1024
          %669 = vsyncadd %s663, %s668
          %s670 = smul.addr %s46, 16
          %s671 = smul.addr %s670, 64
          %s672 = scalar_lea.hbm %s11, %s671
          %s673 = sshll.u32 %s666, 4
          %s674 = int_to_ptr.vmem [resolvable:$true] %s673
          %679 = dma.hbm_to_vmem [thread:$0]  %s672, 1024, %s674, %s663, 64, 64, 4
        $region72: #{tpu_custom_call.1} parent=31 // pred_fallthru
          _
        // Predicated region
        $region73: #{tpu_custom_call.1} parent=31 // pred_check
          %p680 = pneg %p372
        $region74: #{tpu_custom_call.1} parent=31 // pred_check_branch
          %682 = sbr.rel (%p680) target = $region76
        $region75: #{tpu_custom_call.1} parent=31 // pred_region
          %p683 = scmp.lt.s32.totalorder %s46, 1
          %s684 = scalar_select %p683, %s46, 1
          %s685 = scalar_lea.vmem %s12, %s684
        $region76: #{tpu_custom_call.1} parent=31 // pred_fallthru
          _
        // Predicated region
        $region77: #{tpu_custom_call.1} parent=31 // pred_check
          %p686 = pneg %p398
        $region78: #{tpu_custom_call.1} parent=31 // pred_check_branch
          %688 = sbr.rel (%p686) target = $region80
        $region79: #{tpu_custom_call.1} parent=31 // pred_region
          %p689 = scmp.lt.s32.totalorder %s46, 1
          %s690 = scalar_select %p689, %s46, 1
          %s691 = scalar_lea.vmem %s13, %s690
        $region80: #{tpu_custom_call.1} parent=31 // pred_fallthru
          _
        // Predicated region
        $region81: #{tpu_custom_call.1} parent=31 // pred_check
          %p692 = pneg %p424
        $region82: #{tpu_custom_call.1} parent=31 // pred_check_branch
          %694 = sbr.rel (%p692) target = $region84
        $region83: #{tpu_custom_call.1} parent=31 // pred_region
          %p695 = scmp.lt.s32.totalorder %s46, 1
          %s696 = scalar_select %p695, %s46, 1
          %s697 = scalar_lea.vmem %s14, %s696
        $region84: #{tpu_custom_call.1} parent=31 // pred_fallthru
          _
      $region32: #{tpu_custom_call.1} parent=5 // pred_fallthru
        _
      %p698 = scmp.le.s32.totalorder 1, %s38
      %p699 = scmp.lt.s32.totalorder %s38, 5
      %p700 = pnand %p698, %p699
      %p701 = pneg %p700
      // Predicated region
      $region85: #{tpu_custom_call.1} parent=5 // pred_check
        _
      $region86: #{tpu_custom_call.1} parent=5 // pred_check_branch
        %703 = sbr.rel (%p700) target = $region88
      $region87: #{tpu_custom_call.1} parent=5 // pred_region
        %s704 = ssub.s32 %s38, 1
        %s705 = sand.u32 %s63, 1
        %s706 = scalar_lea.sflag [#allocation5], %s705
        %s707 = sand.u32 %s63, 1
        %s708 = smul.addr %s707, 8
        %s709 = scalar_lea.vmem [#allocation4], %s708
        // Predicated region
        $region89: #{tpu_custom_call.1} parent=87 // pred_check
          %p710 = pneg %p76
        $region90: #{tpu_custom_call.1} parent=87 // pred_check_branch
          %712 = sbr.rel (%p710) target = $region92
        $region91: #{tpu_custom_call.1} parent=87 // pred_region
          %713 = dma.done %s706, 128
        $region92: #{tpu_custom_call.1} parent=87 // pred_fallthru
          _
        // Predicated region
        $region93: #{tpu_custom_call.1} parent=87 // pred_check
          %p714 = pneg %p97
        $region94: #{tpu_custom_call.1} parent=87 // pred_check_branch
          %716 = sbr.rel (%p714) target = $region96
        $region95: #{tpu_custom_call.1} parent=87 // pred_region
          %717 = dma.done [#allocation8], 1024
        $region96: #{tpu_custom_call.1} parent=87 // pred_fallthru
          _
        // Predicated region
        $region97: #{tpu_custom_call.1} parent=87 // pred_check
          %p718 = pneg %p118
        $region98: #{tpu_custom_call.1} parent=87 // pred_check_branch
          %720 = sbr.rel (%p718) target = $region100
        $region99: #{tpu_custom_call.1} parent=87 // pred_region
          %721 = dma.done [#allocation8], 16
        $region100: #{tpu_custom_call.1} parent=87 // pred_fallthru
          _
        %s722 = sand.u32 %s43, 1
        %s723 = scalar_lea.sflag [#allocation11], %s722
        %s724 = sand.u32 %s131, 1
        %s725 = smul.addr %s724, 192
        %s726 = scalar_lea.vmem [#allocation10], %s725
        // Predicated region
        $region101: #{tpu_custom_call.1} parent=87 // pred_check
          %p727 = pneg %p144
        $region102: #{tpu_custom_call.1} parent=87 // pred_check_branch
          %729 = sbr.rel (%p727) target = $region104
        $region103: #{tpu_custom_call.1} parent=87 // pred_region
          %730 = dma.done %s723, 3072
        $region104: #{tpu_custom_call.1} parent=87 // pred_fallthru
          _
        %s731 = sand.u32 %s43, 1
        %s732 = scalar_lea.sflag [#allocation11], %s731
        %s733 = sand.u32 %s183, 1
        %s734 = smul.addr %s733, 64
        %s735 = scalar_lea.vmem [#allocation12], %s734
        // Predicated region
        $region105: #{tpu_custom_call.1} parent=87 // pred_check
          %p736 = pneg %p196
        $region106: #{tpu_custom_call.1} parent=87 // pred_check_branch
          %738 = sbr.rel (%p736) target = $region108
        $region107: #{tpu_custom_call.1} parent=87 // pred_region
          %739 = dma.done %s732, 1024
        $region108: #{tpu_custom_call.1} parent=87 // pred_fallthru
          _
        %s740 = sand.u32 %s43, 1
        %s741 = scalar_lea.sflag [#allocation14], %s740
        %s742 = sand.u32 %s287, 1
        %s743 = smul.addr %s742, 64
        %s744 = scalar_lea.vmem [#allocation13], %s743
        // Predicated region
        $region109: #{tpu_custom_call.1} parent=87 // pred_check
          %p745 = pneg %p300
        $region110: #{tpu_custom_call.1} parent=87 // pred_check_branch
          %747 = sbr.rel (%p745) target = $region112
        $region111: #{tpu_custom_call.1} parent=87 // pred_region
          %748 = dma.done %s741, 1024
        $region112: #{tpu_custom_call.1} parent=87 // pred_fallthru
          _
        %s749 = sand.u32 %s43, 1
        %s750 = scalar_lea.sflag [#allocation14], %s749
        %s751 = sand.u32 %s339, 1
        %s752 = smul.addr %s751, 64
        %s753 = scalar_lea.vmem [#allocation15], %s752
        // Predicated region
        $region113: #{tpu_custom_call.1} parent=87 // pred_check
          %p754 = pneg %p352
        $region114: #{tpu_custom_call.1} parent=87 // pred_check_branch
          %756 = sbr.rel (%p754) target = $region116
        $region115: #{tpu_custom_call.1} parent=87 // pred_region
          %757 = dma.done %s750, 1024
        $region116: #{tpu_custom_call.1} parent=87 // pred_fallthru
          _
        %s758 = sand.u32 %s63, 1
        %s759 = scalar_lea.sflag [#allocation5], %s758
        %s760 = sand.u32 %s63, 1
        %s761 = smul.addr %s760, 8
        %s762 = scalar_lea.vmem [#allocation4], %s761
        %p763 = pneg %p76
        %p764 = pneg %p73
        %p765 = pneg %p97
        %p766 = pneg %p94
        %p767 = pneg %p118
        %p768 = pneg %p115
        %s769 = sand.u32 %s43, 1
        %s770 = scalar_lea.sflag [#allocation11], %s769
        %s771 = sand.u32 %s131, 1
        %s772 = smul.addr %s771, 192
        %s773 = scalar_lea.vmem [#allocation10], %s772
        %p774 = pneg %p144
        %p775 = pneg %p141
        %p776 = scmp.lt.s32.totalorder %s48, 1
        %s777 = scalar_select %p776, %s48, 1
        %s778 = smul.addr %s777, 3
        %s779 = scalar_lea.vmem %s4, %s778
        %p780 = pneg %p170
        %p781 = pneg %p167
        %s782 = sand.u32 %s43, 1
        %s783 = scalar_lea.sflag [#allocation11], %s782
        %s784 = sand.u32 %s183, 1
        %s785 = smul.addr %s784, 64
        %s786 = scalar_lea.vmem [#allocation12], %s785
        %p787 = pneg %p196
        %p788 = pneg %p193
        %p789 = scmp.lt.s32.totalorder %s48, 1
        %s790 = scalar_select %p789, %s48, 1
        %s791 = scalar_lea.vmem %s6, %s790
        %p792 = pneg %p222
        %p793 = pneg %p219
        %p794 = scmp.lt.s32.totalorder %s48, 1
        %s795 = scalar_select %p794, %s48, 1
        %s796 = scalar_lea.vmem %s7, %s795
        %p797 = pneg %p248
        %p798 = pneg %p245
        %p799 = scmp.lt.s32.totalorder %s48, 1
        %s800 = scalar_select %p799, %s48, 1
        %s801 = scalar_lea.vmem %s8, %s800
        %p802 = pneg %p274
        %p803 = pneg %p271
        %s804 = sand.u32 %s43, 1
        %s805 = scalar_lea.sflag [#allocation14], %s804
        %s806 = sand.u32 %s287, 1
        %s807 = smul.addr %s806, 64
        %s808 = scalar_lea.vmem [#allocation13], %s807
        %p809 = pneg %p300
        %p810 = pneg %p297
        %p811 = scmp.lt.s32.totalorder %s48, 1
        %s812 = scalar_select %p811, %s48, 1
        %s813 = scalar_lea.vmem %s10, %s812
        %p814 = pneg %p326
        %p815 = pneg %p323
        %s816 = sand.u32 %s43, 1
        %s817 = scalar_lea.sflag [#allocation14], %s816
        %s818 = sand.u32 %s339, 1
        %s819 = smul.addr %s818, 64
        %s820 = scalar_lea.vmem [#allocation15], %s819
        %p821 = pneg %p352
        %p822 = pneg %p349
        %p823 = scmp.lt.s32.totalorder %s48, 1
        %s824 = scalar_select %p823, %s48, 1
        %s825 = scalar_lea.vmem %s12, %s824
        %p826 = pneg %p378
        %p827 = pneg %p375
        %p828 = scmp.lt.s32.totalorder %s48, 1
        %s829 = scalar_select %p828, %s48, 1
        %s830 = scalar_lea.vmem %s13, %s829
        %p831 = pneg %p404
        %p832 = pneg %p401
        %p833 = scmp.lt.s32.totalorder %s48, 1
        %s834 = scalar_select %p833, %s48, 1
        %s835 = scalar_lea.vmem %s14, %s834
        %p836 = pneg %p430
        %p837 = pneg %p427
        %p838 = pneg %p451
        %p839 = pneg %p448
        %p840 = pneg %p472
        %p841 = pneg %p469
        %p842 = pneg %p498
        %p843 = pneg %p495
        %s844 = sand.u32 %s485, 1
        %s845 = scalar_lea.sflag [#allocation6], %s844
        %s846 = sand.u32 %s485, 1
        %s847 = scalar_lea.vmem [#allocation16], %s846
        %p848 = scmp.lt.s32.totalorder %s48, 1
        %s849 = scalar_select %p848, %s48, 1
        %s850 = smul.addr %s849, 3
        %s851 = scalar_lea.vmem %s4, %s850
        %p852 = scmp.lt.s32.totalorder %s48, 1
        %s853 = scalar_select %p852, %s48, 1
        %s854 = scalar_lea.vmem %s6, %s853
        %p855 = scmp.lt.s32.totalorder %s48, 1
        %s856 = scalar_select %p855, %s48, 1
        %s857 = scalar_lea.vmem %s7, %s856
        %p858 = scmp.lt.s32.totalorder %s48, 1
        %s859 = scalar_select %p858, %s48, 1
        %s860 = scalar_lea.vmem %s8, %s859
        %p861 = scmp.lt.s32.totalorder %s48, 1
        %s862 = scalar_select %p861, %s48, 1
        %s863 = scalar_lea.vmem %s10, %s862
        %p864 = scmp.lt.s32.totalorder %s48, 1
        %s865 = scalar_select %p864, %s48, 1
        %s866 = scalar_lea.vmem %s12, %s865
        %p867 = scmp.lt.s32.totalorder %s48, 1
        %s868 = scalar_select %p867, %s48, 1
        %s869 = scalar_lea.vmem %s13, %s868
        %p870 = scmp.lt.s32.totalorder %s48, 1
        %s871 = scalar_select %p870, %s48, 1
        %s872 = scalar_lea.vmem %s14, %s871
        %p874 = scmp.eq.s32.totalorder %s48, 0
        // Predicated region
        $region117: #{tpu_custom_call.1} parent=87 // pred_check
          %p875 = pneg %p874
        $region118: #{tpu_custom_call.1} parent=87 // pred_check_branch
          %877 = sbr.rel (%p875) target = $region120
        $region119: #{tpu_custom_call.1} parent=87 // pred_region
          %v878 = vld [vmem:[%s709] sm:$0xff]
          %v879 = vpack.c.bf16 %v878, %v878
          %v880 = vld [vmem:[#allocation7] sm:$0xf]
          %v881 = vld [vmem:[#allocation7 + $0x4] sm:$0xf]
          %v882 = vld [vmem:[#allocation7 + $0x8] sm:$0xf]
          %v883 = vld [vmem:[#allocation7 + $0xc] sm:$0xf]
          %v884 = vld [vmem:[#allocation7 + $0x10] sm:$0xf]
          %v885 = vld [vmem:[#allocation7 + $0x14] sm:$0xf]
          %v886 = vld [vmem:[#allocation7 + $0x18] sm:$0xf]
          %v887 = vld [vmem:[#allocation7 + $0x1c] sm:$0xf]
          %v888 = vld [vmem:[#allocation7 + $0x20] sm:$0xf]
          %v889 = vld [vmem:[#allocation7 + $0x24] sm:$0xf]
          %v890 = vld [vmem:[#allocation7 + $0x28] sm:$0xf]
          %v891 = vld [vmem:[#allocation7 + $0x2c] sm:$0xf]
          %v892 = vld [vmem:[#allocation7 + $0x30] sm:$0xf]
          %v893 = vld [vmem:[#allocation7 + $0x34] sm:$0xf]
          %v894 = vld [vmem:[#allocation7 + $0x38] sm:$0xf]
          %v895 = vld [vmem:[#allocation7 + $0x3c] sm:$0xf]
          %v896 = vld [vmem:[#allocation9] sm:$0x1]
          %v898 = vlaneseq
          %v899 = vshrl.u32 %v898, 7
          %v900 = vsub.s32 0, %v899
          %v901 = vrot.slane %v896, %v900
          %v919 = vunpack.c.l.b16 %v880
          %v920 = vunpack.c.l.b16 %v881
          %v921 = vunpack.c.l.b16 %v882
          %v922 = vunpack.c.l.b16 %v883
          %v923 = vunpack.c.l.b16 %v884
          %v924 = vunpack.c.l.b16 %v885
          %v925 = vunpack.c.l.b16 %v886
          %v926 = vunpack.c.l.b16 %v887
          %v927 = vunpack.c.l.b16 %v888
          %v928 = vunpack.c.l.b16 %v889
          %v929 = vunpack.c.l.b16 %v890
          %v930 = vunpack.c.l.b16 %v891
          %v931 = vunpack.c.l.b16 %v892
          %v932 = vunpack.c.l.b16 %v893
          %v933 = vunpack.c.l.b16 %v894
          %v934 = vunpack.c.l.b16 %v895
          %v935 = vpack.c.b16 %v920, %v919
          %v936 = vpack.c.b16 %v922, %v921
          %v937 = vpack.c.b16 %v924, %v923
          %v938 = vpack.c.b16 %v926, %v925
          %v939 = vpack.c.b16 %v928, %v927
          %v940 = vpack.c.b16 %v930, %v929
          %v941 = vpack.c.b16 %v932, %v931
          %v942 = vpack.c.b16 %v934, %v933
          %951 = vmatprep.subr.bf16.mxu0 0
          %952 = vmatpush1.bf16.msra.mxu0 %v935
          %953 = vmatprep.subr.bf16.mxu0 0
          %954 = vmatpush1.bf16.msra.mxu0 %v936
          %955 = vmatprep.subr.bf16.mxu0 0
          %956 = vmatpush1.bf16.msra.mxu0 %v937
          %957 = vmatprep.subr.bf16.mxu0 0
          %958 = vmatpush1.bf16.msra.mxu0 %v938
          %959 = vmatprep.subr.bf16.mxu0 0
          %960 = vmatpush1.bf16.msra.mxu0 %v939
          %961 = vmatprep.subr.bf16.mxu0 0
          %962 = vmatpush1.bf16.msra.mxu0 %v940
          %963 = vmatprep.subr.bf16.mxu0 0
          %964 = vmatpush1.bf16.msra.mxu0 %v941
          %965 = vmatprep.subr.bf16.mxu0 0
          %966 = vmatpush1.bf16.msra.mxu0 %v942
          %967 = vmatprep.subr.bf16.mxu0 0
          %968 = vmatpush1.bf16.msra.mxu0 0
          %969 = vmatprep.subr.bf16.mxu0 0
          %970 = vmatpush1.bf16.msra.mxu0 0
          %971 = vmatprep.subr.bf16.mxu0 0
          %972 = vmatpush1.bf16.msra.mxu0 0
          %973 = vmatprep.subr.bf16.mxu0 0
          %974 = vmatpush1.bf16.msra.mxu0 0
          %975 = vmatprep.subr.bf16.mxu0 0
          %976 = vmatpush1.bf16.msra.mxu0 0
          %977 = vmatprep.subr.bf16.mxu0 0
          %978 = vmatpush1.bf16.msra.mxu0 0
          %979 = vmatprep.subr.bf16.mxu0 0
          %980 = vmatpush1.bf16.msra.mxu0 0
          %981 = vmatprep.subr.bf16.mxu0 0
          %982 = vmatpush1.bf16.msra.mxu0 0
          %983 = vmatprep.mubr.bf16.mxu0 0
          %984 = vmatmul.mubr.bf16.gmra.mrb[0].mxu0 %v879
          %v985 = vpop.f32.mrb[0].mxu0
          %v986 = vadd.f32 %v901, %v985
          %v987 = vpop.f32.mrb[0].mxu0
          %v988 = vpop.f32.mrb[0].mxu0
          %v989 = vpop.f32.mrb[0].mxu0
          %990 = vdwg.mxu0
          %991 = vst [vmem:[#allocation2] sm:$0xff] %v986
        $region120: #{tpu_custom_call.1} parent=87 // pred_fallthru
          _
        %v992 = vld [vmem:[#allocation2] sm:$0xff]
        %v993 = vpack.c.bf16 %v992, %v992
        %v994 = vld [vmem:[%s726] sm:$0xff]
        %v995 = vld [vmem:[%s726 + $0x8] sm:$0xf]
        %v996 = vld [vmem:[%s726 + $0xc] sm:$0xff]
        %v997 = vld [vmem:[%s726 + $0x14] sm:$0xf]
        %v998 = vld [vmem:[%s726 + $0x18] sm:$0xff]
        %v999 = vld [vmem:[%s726 + $0x20] sm:$0xf]
        %v1000 = vld [vmem:[%s726 + $0x24] sm:$0xff]
        %v1001 = vld [vmem:[%s726 + $0x2c] sm:$0xf]
        %v1002 = vld [vmem:[%s726 + $0x30] sm:$0xff]
        %v1003 = vld [vmem:[%s726 + $0x38] sm:$0xf]
        %v1004 = vld [vmem:[%s726 + $0x3c] sm:$0xff]
        %v1005 = vld [vmem:[%s726 + $0x44] sm:$0xf]
        %v1006 = vld [vmem:[%s726 + $0x48] sm:$0xff]
        %v1007 = vld [vmem:[%s726 + $0x50] sm:$0xf]
        %v1008 = vld [vmem:[%s726 + $0x54] sm:$0xff]
        %v1009 = vld [vmem:[%s726 + $0x5c] sm:$0xf]
        %v1010 = vld [vmem:[%s726 + $0x60] sm:$0xff]
        %v1011 = vld [vmem:[%s726 + $0x68] sm:$0xf]
        %v1012 = vld [vmem:[%s726 + $0x6c] sm:$0xff]
        %v1013 = vld [vmem:[%s726 + $0x74] sm:$0xf]
        %v1014 = vld [vmem:[%s726 + $0x78] sm:$0xff]
        %v1015 = vld [vmem:[%s726 + $0x80] sm:$0xf]
        %v1016 = vld [vmem:[%s726 + $0x84] sm:$0xff]
        %v1017 = vld [vmem:[%s726 + $0x8c] sm:$0xf]
        %v1018 = vld [vmem:[%s726 + $0x90] sm:$0xff]
        %v1019 = vld [vmem:[%s726 + $0x98] sm:$0xf]
        %v1020 = vld [vmem:[%s726 + $0x9c] sm:$0xff]
        %v1021 = vld [vmem:[%s726 + $0xa4] sm:$0xf]
        %v1022 = vld [vmem:[%s726 + $0xa8] sm:$0xff]
        %v1023 = vld [vmem:[%s726 + $0xb0] sm:$0xf]
        %v1024 = vld [vmem:[%s726 + $0xb4] sm:$0xff]
        %v1025 = vld [vmem:[%s726 + $0xbc] sm:$0xf]
        %v1026 = vld [vmem:[%s851] sm:$0x7]
        %v1028 = vlaneseq
        %v1029 = vshrl.u32 %v1028, 7
        %v1030 = vsub.s32 0, %v1029
        %v1031 = vrot.slane %v1026, %v1030
        %v1032 = vlaneseq
        %v1033 = vshrl.u32 %v1032, 7
        %v1034 = vsub.s32 1, %v1033
        %v1035 = vrot.slane %v1026, %v1034
        %v1036 = vlaneseq
        %v1037 = vshrl.u32 %v1036, 7
        %v1038 = vsub.s32 2, %v1037
        %v1039 = vrot.slane %v1026, %v1038
        %v1075 = vunpack.c.l.b16 %v994
        %v1076 = vunpack.c.h.b16 %v994
        %v1077 = vunpack.c.l.b16 %v995
        %v1078 = vunpack.c.l.b16 %v996
        %v1079 = vunpack.c.h.b16 %v996
        %v1080 = vunpack.c.l.b16 %v997
        %v1081 = vunpack.c.l.b16 %v998
        %v1082 = vunpack.c.h.b16 %v998
        %v1083 = vunpack.c.l.b16 %v999
        %v1084 = vunpack.c.l.b16 %v1000
        %v1085 = vunpack.c.h.b16 %v1000
        %v1086 = vunpack.c.l.b16 %v1001
        %v1087 = vunpack.c.l.b16 %v1002
        %v1088 = vunpack.c.h.b16 %v1002
        %v1089 = vunpack.c.l.b16 %v1003
        %v1090 = vunpack.c.l.b16 %v1004
        %v1091 = vunpack.c.h.b16 %v1004
        %v1092 = vunpack.c.l.b16 %v1005
        %v1093 = vunpack.c.l.b16 %v1006
        %v1094 = vunpack.c.h.b16 %v1006
        %v1095 = vunpack.c.l.b16 %v1007
        %v1096 = vunpack.c.l.b16 %v1008
        %v1097 = vunpack.c.h.b16 %v1008
        %v1098 = vunpack.c.l.b16 %v1009
        %v1099 = vunpack.c.l.b16 %v1010
        %v1100 = vunpack.c.h.b16 %v1010
        %v1101 = vunpack.c.l.b16 %v1011
        %v1102 = vunpack.c.l.b16 %v1012
        %v1103 = vunpack.c.h.b16 %v1012
        %v1104 = vunpack.c.l.b16 %v1013
        %v1105 = vunpack.c.l.b16 %v1014
        %v1106 = vunpack.c.h.b16 %v1014
        %v1107 = vunpack.c.l.b16 %v1015
        %v1108 = vunpack.c.l.b16 %v1016
        %v1109 = vunpack.c.h.b16 %v1016
        %v1110 = vunpack.c.l.b16 %v1017
        %v1111 = vunpack.c.l.b16 %v1018
        %v1112 = vunpack.c.h.b16 %v1018
        %v1113 = vunpack.c.l.b16 %v1019
        %v1114 = vunpack.c.l.b16 %v1020
        %v1115 = vunpack.c.h.b16 %v1020
        %v1116 = vunpack.c.l.b16 %v1021
        %v1117 = vunpack.c.l.b16 %v1022
        %v1118 = vunpack.c.h.b16 %v1022
        %v1119 = vunpack.c.l.b16 %v1023
        %v1120 = vunpack.c.l.b16 %v1024
        %v1121 = vunpack.c.h.b16 %v1024
        %v1122 = vunpack.c.l.b16 %v1025
        %v1123 = vpack.c.b16 %v1078, %v1075
        %v1124 = vpack.c.b16 %v1079, %v1076
        %v1125 = vpack.c.b16 %v1080, %v1077
        %v1126 = vpack.c.b16 %v1084, %v1081
        %v1127 = vpack.c.b16 %v1085, %v1082
        %v1128 = vpack.c.b16 %v1086, %v1083
        %v1129 = vpack.c.b16 %v1090, %v1087
        %v1130 = vpack.c.b16 %v1091, %v1088
        %v1131 = vpack.c.b16 %v1092, %v1089
        %v1132 = vpack.c.b16 %v1096, %v1093
        %v1133 = vpack.c.b16 %v1097, %v1094
        %v1134 = vpack.c.b16 %v1098, %v1095
        %v1135 = vpack.c.b16 %v1102, %v1099
        %v1136 = vpack.c.b16 %v1103, %v1100
        %v1137 = vpack.c.b16 %v1104, %v1101
        %v1138 = vpack.c.b16 %v1108, %v1105
        %v1139 = vpack.c.b16 %v1109, %v1106
        %v1140 = vpack.c.b16 %v1110, %v1107
        %v1141 = vpack.c.b16 %v1114, %v1111
        %v1142 = vpack.c.b16 %v1115, %v1112
        %v1143 = vpack.c.b16 %v1116, %v1113
        %v1144 = vpack.c.b16 %v1120, %v1117
        %v1145 = vpack.c.b16 %v1121, %v1118
        %v1146 = vpack.c.b16 %v1122, %v1119
        %1171 = vmatprep.subr.bf16.mxu0 %v1124
        %1172 = vmatpush1.bf16.msra.mxu0 %v1123
        %1173 = vmatprep.subr.bf16.mxu0 %v1127
        %1174 = vmatpush1.bf16.msra.mxu0 %v1126
        %1175 = vmatprep.subr.bf16.mxu0 %v1130
        %1176 = vmatpush1.bf16.msra.mxu0 %v1129
        %1177 = vmatprep.subr.bf16.mxu0 %v1133
        %1178 = vmatpush1.bf16.msra.mxu0 %v1132
        %1179 = vmatprep.subr.bf16.mxu0 %v1136
        %1180 = vmatpush1.bf16.msra.mxu0 %v1135
        %1181 = vmatprep.subr.bf16.mxu0 %v1139
        %1182 = vmatpush1.bf16.msra.mxu0 %v1138
        %1183 = vmatprep.subr.bf16.mxu0 %v1142
        %1184 = vmatpush1.bf16.msra.mxu0 %v1141
        %1185 = vmatprep.subr.bf16.mxu0 %v1145
        %1186 = vmatpush1.bf16.msra.mxu0 %v1144
        %1187 = vmatprep.subr.bf16.mxu0 0
        %1188 = vmatpush1.bf16.msra.mxu0 0
        %1189 = vmatprep.subr.bf16.mxu0 0
        %1190 = vmatpush1.bf16.msra.mxu0 0
        %1191 = vmatprep.subr.bf16.mxu0 0
        %1192 = vmatpush1.bf16.msra.mxu0 0
        %1193 = vmatprep.subr.bf16.mxu0 0
        %1194 = vmatpush1.bf16.msra.mxu0 0
        %1195 = vmatprep.subr.bf16.mxu0 0
        %1196 = vmatpush1.bf16.msra.mxu0 0
        %1197 = vmatprep.subr.bf16.mxu0 0
        %1198 = vmatpush1.bf16.msra.mxu0 0
        %1199 = vmatprep.subr.bf16.mxu0 0
        %1200 = vmatpush1.bf16.msra.mxu0 0
        %1201 = vmatprep.subr.bf16.mxu0 0
        %1202 = vmatpush1.bf16.msra.mxu0 0
        %1203 = vmatprep.mubr.bf16.mxu0 0
        %1204 = vmatmul.mubr.bf16.gmra.mrb[0].mxu0 %v993
        %v1205 = vpop.f32.mrb[0].mxu0
        %v1206 = vadd.f32 %v1031, %v1205
        %v1207 = vpop.f32.mrb[0].mxu0
        %v1208 = vadd.f32 %v1035, %v1207
        %v1209 = vpop.f32.mrb[0].mxu0
        %v1210 = vpop.f32.mrb[0].mxu0
        %1211 = vdwg.mxu0
        %1212 = vmatprep.subr.bf16.mxu0 0
        %1213 = vmatpush1.bf16.msra.mxu0 %v1125
        %1214 = vmatprep.subr.bf16.mxu0 0
        %1215 = vmatpush1.bf16.msra.mxu0 %v1128
        %1216 = vmatprep.subr.bf16.mxu0 0
        %1217 = vmatpush1.bf16.msra.mxu0 %v1131
        %1218 = vmatprep.subr.bf16.mxu0 0
        %1219 = vmatpush1.bf16.msra.mxu0 %v1134
        %1220 = vmatprep.subr.bf16.mxu0 0
        %1221 = vmatpush1.bf16.msra.mxu0 %v1137
        %1222 = vmatprep.subr.bf16.mxu0 0
        %1223 = vmatpush1.bf16.msra.mxu0 %v1140
        %1224 = vmatprep.subr.bf16.mxu0 0
        %1225 = vmatpush1.bf16.msra.mxu0 %v1143
        %1226 = vmatprep.subr.bf16.mxu0 0
        %1227 = vmatpush1.bf16.msra.mxu0 %v1146
        %1228 = vmatprep.subr.bf16.mxu0 0
        %1229 = vmatpush1.bf16.msra.mxu0 0
        %1230 = vmatprep.subr.bf16.mxu0 0
        %1231 = vmatpush1.bf16.msra.mxu0 0
        %1232 = vmatprep.subr.bf16.mxu0 0
        %1233 = vmatpush1.bf16.msra.mxu0 0
        %1234 = vmatprep.subr.bf16.mxu0 0
        %1235 = vmatpush1.bf16.msra.mxu0 0
        %1236 = vmatprep.subr.bf16.mxu0 0
        %1237 = vmatpush1.bf16.msra.mxu0 0
        %1238 = vmatprep.subr.bf16.mxu0 0
        %1239 = vmatpush1.bf16.msra.mxu0 0
        %1240 = vmatprep.subr.bf16.mxu0 0
        %1241 = vmatpush1.bf16.msra.mxu0 0
        %1242 = vmatprep.subr.bf16.mxu0 0
        %1243 = vmatpush1.bf16.msra.mxu0 0
        %1244 = vmatprep.mubr.bf16.mxu0 0
        %1245 = vmatmul.mubr.bf16.gmra.mrb[0].mxu0 %v993
        %v1246 = vpop.f32.mrb[0].mxu0
        %v1247 = vadd.f32 %v1039, %v1246
        %v1248 = vpop.f32.mrb[0].mxu0
        %v1249 = vpop.f32.mrb[0].mxu0
        %v1250 = vpop.f32.mrb[0].mxu0
        %1251 = vdwg.mxu0
        %v1252 = vmul.f32 %v1206, 0.17677669
        %1254 = vrot.lane.b32.xlu0 %v1252, 96
        %v1255 = vpop.permute.xlu0 %1254
        %1257 = vrot.lane.b32.xlu0 %v1252, 64
        %v1258 = vpop.permute.xlu0 %1257
        %1260 = vrot.lane.b32.xlu0 %v1252, 32
        %v1261 = vpop.permute.xlu0 %1260
        %v1263 = vcombine.low %v1252, %v1258
        %v1264 = vcombine.high %v1252, %v1258
        %v1266 = vunpack.c.l.s4 1983009808
        %v1267 = vunpack.c.0.s8 %v1266
        %v1268 = vlaneseq
        %v1269 = vshrl.u32 %v1268, 7
        %v1270 = vsub.s32 %v1267, %v1269
        %v1271 = vrot.slane %v1263, %v1270
        %v1273 = vunpack.c.l.s4 1983009808
        %v1274 = vunpack.c.0.s8 %v1273
        %v1275 = vlaneseq
        %v1276 = vshrl.u32 %v1275, 7
        %v1277 = vsub.s32 %v1274, %v1276
        %v1278 = vrot.slane %v1264, %v1277
        %v1279 = vcombine.low %v1255, %v1261
        %v1280 = vcombine.high %v1255, %v1261
        %v1282 = vunpack.c.l.s4 1983009808
        %v1283 = vunpack.c.0.s8 %v1282
        %v1284 = vlaneseq
        %v1285 = vshrl.u32 %v1284, 7
        %v1286 = vsub.s32 %v1283, %v1285
        %v1287 = vrot.slane %v1279, %v1286
        %v1289 = vunpack.c.l.s4 1983009808
        %v1290 = vunpack.c.0.s8 %v1289
        %v1291 = vlaneseq
        %v1292 = vshrl.u32 %v1291, 7
        %v1293 = vsub.s32 %v1290, %v1292
        %v1294 = vrot.slane %v1280, %v1293
        %v1295 = vcombine.low %v1271, %v1287
        %v1296 = vcombine.high %v1271, %v1287
        %v1298 = vunpack.c.l.s4 1934713408
        %v1299 = vunpack.c.0.s8 %v1298
        %v1300 = vlaneseq
        %v1301 = vshrl.u32 %v1300, 7
        %v1302 = vsub.s32 %v1299, %v1301
        %v1303 = vrot.slane %v1295, %v1302
        %v1305 = vunpack.c.l.s4 1934713408
        %v1306 = vunpack.c.0.s8 %v1305
        %v1307 = vlaneseq
        %v1308 = vshrl.u32 %v1307, 7
        %v1309 = vsub.s32 %v1306, %v1308
        %v1310 = vrot.slane %v1296, %v1309
        %v1311 = vcombine.low %v1278, %v1294
        %v1312 = vcombine.high %v1278, %v1294
        %v1314 = vunpack.c.l.s4 1934713408
        %v1315 = vunpack.c.0.s8 %v1314
        %v1316 = vlaneseq
        %v1317 = vshrl.u32 %v1316, 7
        %v1318 = vsub.s32 %v1315, %v1317
        %v1319 = vrot.slane %v1311, %v1318
        %v1321 = vunpack.c.l.s4 1934713408
        %v1322 = vunpack.c.0.s8 %v1321
        %v1323 = vlaneseq
        %v1324 = vshrl.u32 %v1323, 7
        %v1325 = vsub.s32 %v1322, %v1324
        %v1326 = vrot.slane %v1312, %v1325
        %v1327 = vcombine.high %v1303, 0.0
        %v1328 = vcombine.high %v1310, 0.0
        %v1329 = vcombine.high %v1319, 0.0
        %v1330 = vcombine.high %v1326, 0.0
        %v1331 = vcombine.low %v1303, %v1310
        %v1333 = vunpack.c.l.s4 1983009808
        %v1334 = vunpack.c.0.s8 %v1333
        %v1335 = vlaneseq
        %v1336 = vshrl.u32 %v1335, 7
        %v1337 = vsub.s32 %v1334, %v1336
        %v1338 = vrot.slane %v1331, %v1337
        %v1339 = vcombine.low %v1327, %v1328
        %v1341 = vunpack.c.l.s4 1983009808
        %v1342 = vunpack.c.0.s8 %v1341
        %v1343 = vlaneseq
        %v1344 = vshrl.u32 %v1343, 7
        %v1345 = vsub.s32 %v1342, %v1344
        %v1346 = vrot.slane %v1339, %v1345
        %v1347 = vcombine.low %v1319, %v1326
        %v1349 = vunpack.c.l.s4 1983009808
        %v1350 = vunpack.c.0.s8 %v1349
        %v1351 = vlaneseq
        %v1352 = vshrl.u32 %v1351, 7
        %v1353 = vsub.s32 %v1350, %v1352
        %v1354 = vrot.slane %v1347, %v1353
        %v1355 = vcombine.low %v1329, %v1330
        %v1357 = vunpack.c.l.s4 1983009808
        %v1358 = vunpack.c.0.s8 %v1357
        %v1359 = vlaneseq
        %v1360 = vshrl.u32 %v1359, 7
        %v1361 = vsub.s32 %v1358, %v1360
        %v1362 = vrot.slane %v1355, %v1361
        %v1363 = vcombine.low %v1338, %v1346
        %v1364 = vcombine.high %v1338, %v1346
        %v1366 = vunpack.c.l.s4 1934713408
        %v1367 = vunpack.c.0.s8 %v1366
        %v1368 = vlaneseq
        %v1369 = vshrl.u32 %v1368, 7
        %v1370 = vsub.s32 %v1367, %v1369
        %v1371 = vrot.slane %v1363, %v1370
        %v1373 = vunpack.c.l.s4 1934713408
        %v1374 = vunpack.c.0.s8 %v1373
        %v1375 = vlaneseq
        %v1376 = vshrl.u32 %v1375, 7
        %v1377 = vsub.s32 %v1374, %v1376
        %v1378 = vrot.slane %v1364, %v1377
        %v1379 = vcombine.low %v1354, %v1362
        %v1380 = vcombine.high %v1354, %v1362
        %v1382 = vunpack.c.l.s4 1934713408
        %v1383 = vunpack.c.0.s8 %v1382
        %v1384 = vlaneseq
        %v1385 = vshrl.u32 %v1384, 7
        %v1386 = vsub.s32 %v1383, %v1385
        %v1387 = vrot.slane %v1379, %v1386
        %v1389 = vunpack.c.l.s4 1934713408
        %v1390 = vunpack.c.0.s8 %v1389
        %v1391 = vlaneseq
        %v1392 = vshrl.u32 %v1391, 7
        %v1393 = vsub.s32 %v1390, %v1392
        %v1394 = vrot.slane %v1380, %v1393
        %v1395 = vcombine.low %v1371, %v1387
        %v1396 = vcombine.high %v1371, %v1387
        %v1397 = vcombine.low %v1378, %v1394
        %v1398 = vcombine.high %v1378, %v1394
        %v1399 = vpack.c.bf16 %v1395, %v1395
        %v1400 = vpack.c.bf16 %v1396, %v1396
        %v1401 = vpack.c.bf16 %v1397, %v1397
        %v1402 = vpack.c.bf16 %v1398, %v1398
        %1404 = vrot.lane.b32.xlu0 %v1208, 96
        %v1405 = vpop.permute.xlu0 %1404
        %1407 = vrot.lane.b32.xlu0 %v1208, 64
        %v1408 = vpop.permute.xlu0 %1407
        %1410 = vrot.lane.b32.xlu0 %v1208, 32
        %v1411 = vpop.permute.xlu0 %1410
        %v1413 = vcombine.low %v1208, %v1408
        %v1414 = vcombine.high %v1208, %v1408
        %v1416 = vunpack.c.l.s4 1983009808
        %v1417 = vunpack.c.0.s8 %v1416
        %v1418 = vlaneseq
        %v1419 = vshrl.u32 %v1418, 7
        %v1420 = vsub.s32 %v1417, %v1419
        %v1421 = vrot.slane %v1413, %v1420
        %v1423 = vunpack.c.l.s4 1983009808
        %v1424 = vunpack.c.0.s8 %v1423
        %v1425 = vlaneseq
        %v1426 = vshrl.u32 %v1425, 7
        %v1427 = vsub.s32 %v1424, %v1426
        %v1428 = vrot.slane %v1414, %v1427
        %v1429 = vcombine.low %v1405, %v1411
        %v1430 = vcombine.high %v1405, %v1411
        %v1432 = vunpack.c.l.s4 1983009808
        %v1433 = vunpack.c.0.s8 %v1432
        %v1434 = vlaneseq
        %v1435 = vshrl.u32 %v1434, 7
        %v1436 = vsub.s32 %v1433, %v1435
        %v1437 = vrot.slane %v1429, %v1436
        %v1439 = vunpack.c.l.s4 1983009808
        %v1440 = vunpack.c.0.s8 %v1439
        %v1441 = vlaneseq
        %v1442 = vshrl.u32 %v1441, 7
        %v1443 = vsub.s32 %v1440, %v1442
        %v1444 = vrot.slane %v1430, %v1443
        %v1445 = vcombine.low %v1421, %v1437
        %v1446 = vcombine.high %v1421, %v1437
        %v1448 = vunpack.c.l.s4 1934713408
        %v1449 = vunpack.c.0.s8 %v1448
        %v1450 = vlaneseq
        %v1451 = vshrl.u32 %v1450, 7
        %v1452 = vsub.s32 %v1449, %v1451
        %v1453 = vrot.slane %v1445, %v1452
        %v1455 = vunpack.c.l.s4 1934713408
        %v1456 = vunpack.c.0.s8 %v1455
        %v1457 = vlaneseq
        %v1458 = vshrl.u32 %v1457, 7
        %v1459 = vsub.s32 %v1456, %v1458
        %v1460 = vrot.slane %v1446, %v1459
        %v1461 = vcombine.low %v1428, %v1444
        %v1462 = vcombine.high %v1428, %v1444
        %v1464 = vunpack.c.l.s4 1934713408
        %v1465 = vunpack.c.0.s8 %v1464
        %v1466 = vlaneseq
        %v1467 = vshrl.u32 %v1466, 7
        %v1468 = vsub.s32 %v1465, %v1467
        %v1469 = vrot.slane %v1461, %v1468
        %v1471 = vunpack.c.l.s4 1934713408
        %v1472 = vunpack.c.0.s8 %v1471
        %v1473 = vlaneseq
        %v1474 = vshrl.u32 %v1473, 7
        %v1475 = vsub.s32 %v1472, %v1474
        %v1476 = vrot.slane %v1462, %v1475
        %v1477 = vcombine.high %v1453, 0.0
        %v1478 = vcombine.high %v1460, 0.0
        %v1479 = vcombine.high %v1469, 0.0
        %v1480 = vcombine.high %v1476, 0.0
        %v1481 = vcombine.low %v1453, %v1460
        %v1483 = vunpack.c.l.s4 1983009808
        %v1484 = vunpack.c.0.s8 %v1483
        %v1485 = vlaneseq
        %v1486 = vshrl.u32 %v1485, 7
        %v1487 = vsub.s32 %v1484, %v1486
        %v1488 = vrot.slane %v1481, %v1487
        %v1489 = vcombine.low %v1477, %v1478
        %v1491 = vunpack.c.l.s4 1983009808
        %v1492 = vunpack.c.0.s8 %v1491
        %v1493 = vlaneseq
        %v1494 = vshrl.u32 %v1493, 7
        %v1495 = vsub.s32 %v1492, %v1494
        %v1496 = vrot.slane %v1489, %v1495
        %v1497 = vcombine.low %v1469, %v1476
        %v1499 = vunpack.c.l.s4 1983009808
        %v1500 = vunpack.c.0.s8 %v1499
        %v1501 = vlaneseq
        %v1502 = vshrl.u32 %v1501, 7
        %v1503 = vsub.s32 %v1500, %v1502
        %v1504 = vrot.slane %v1497, %v1503
        %v1505 = vcombine.low %v1479, %v1480
        %v1507 = vunpack.c.l.s4 1983009808
        %v1508 = vunpack.c.0.s8 %v1507
        %v1509 = vlaneseq
        %v1510 = vshrl.u32 %v1509, 7
        %v1511 = vsub.s32 %v1508, %v1510
        %v1512 = vrot.slane %v1505, %v1511
        %v1513 = vcombine.low %v1488, %v1496
        %v1514 = vcombine.high %v1488, %v1496
        %v1516 = vunpack.c.l.s4 1934713408
        %v1517 = vunpack.c.0.s8 %v1516
        %v1518 = vlaneseq
        %v1519 = vshrl.u32 %v1518, 7
        %v1520 = vsub.s32 %v1517, %v1519
        %v1521 = vrot.slane %v1513, %v1520
        %v1523 = vunpack.c.l.s4 1934713408
        %v1524 = vunpack.c.0.s8 %v1523
        %v1525 = vlaneseq
        %v1526 = vshrl.u32 %v1525, 7
        %v1527 = vsub.s32 %v1524, %v1526
        %v1528 = vrot.slane %v1514, %v1527
        %v1529 = vcombine.low %v1504, %v1512
        %v1530 = vcombine.high %v1504, %v1512
        %v1532 = vunpack.c.l.s4 1934713408
        %v1533 = vunpack.c.0.s8 %v1532
        %v1534 = vlaneseq
        %v1535 = vshrl.u32 %v1534, 7
        %v1536 = vsub.s32 %v1533, %v1535
        %v1537 = vrot.slane %v1529, %v1536
        %v1539 = vunpack.c.l.s4 1934713408
        %v1540 = vunpack.c.0.s8 %v1539
        %v1541 = vlaneseq
        %v1542 = vshrl.u32 %v1541, 7
        %v1543 = vsub.s32 %v1540, %v1542
        %v1544 = vrot.slane %v1530, %v1543
        %v1545 = vcombine.low %v1521, %v1537
        %v1546 = vcombine.high %v1521, %v1537
        %v1547 = vcombine.low %v1528, %v1544
        %v1548 = vcombine.high %v1528, %v1544
        %v1549 = vpack.c.bf16 %v1545, %v1545
        %v1550 = vpack.c.bf16 %v1546, %v1546
        %v1551 = vpack.c.bf16 %v1547, %v1547
        %v1552 = vpack.c.bf16 %v1548, %v1548
        %1554 = vrot.lane.b32.xlu0 %v1247, 96
        %v1555 = vpop.permute.xlu0 %1554
        %1557 = vrot.lane.b32.xlu0 %v1247, 64
        %v1558 = vpop.permute.xlu0 %1557
        %1560 = vrot.lane.b32.xlu0 %v1247, 32
        %v1561 = vpop.permute.xlu0 %1560
        %v1563 = vcombine.low %v1247, %v1558
        %v1564 = vcombine.high %v1247, %v1558
        %v1566 = vunpack.c.l.s4 1983009808
        %v1567 = vunpack.c.0.s8 %v1566
        %v1568 = vlaneseq
        %v1569 = vshrl.u32 %v1568, 7
        %v1570 = vsub.s32 %v1567, %v1569
        %v1571 = vrot.slane %v1563, %v1570
        %v1573 = vunpack.c.l.s4 1983009808
        %v1574 = vunpack.c.0.s8 %v1573
        %v1575 = vlaneseq
        %v1576 = vshrl.u32 %v1575, 7
        %v1577 = vsub.s32 %v1574, %v1576
        %v1578 = vrot.slane %v1564, %v1577
        %v1579 = vcombine.low %v1555, %v1561
        %v1580 = vcombine.high %v1555, %v1561
        %v1582 = vunpack.c.l.s4 1983009808
        %v1583 = vunpack.c.0.s8 %v1582
        %v1584 = vlaneseq
        %v1585 = vshrl.u32 %v1584, 7
        %v1586 = vsub.s32 %v1583, %v1585
        %v1587 = vrot.slane %v1579, %v1586
        %v1589 = vunpack.c.l.s4 1983009808
        %v1590 = vunpack.c.0.s8 %v1589
        %v1591 = vlaneseq
        %v1592 = vshrl.u32 %v1591, 7
        %v1593 = vsub.s32 %v1590, %v1592
        %v1594 = vrot.slane %v1580, %v1593
        %v1595 = vcombine.low %v1571, %v1587
        %v1596 = vcombine.high %v1571, %v1587
        %v1598 = vunpack.c.l.s4 1934713408
        %v1599 = vunpack.c.0.s8 %v1598
        %v1600 = vlaneseq
        %v1601 = vshrl.u32 %v1600, 7
        %v1602 = vsub.s32 %v1599, %v1601
        %v1603 = vrot.slane %v1595, %v1602
        %v1605 = vunpack.c.l.s4 1934713408
        %v1606 = vunpack.c.0.s8 %v1605
        %v1607 = vlaneseq
        %v1608 = vshrl.u32 %v1607, 7
        %v1609 = vsub.s32 %v1606, %v1608
        %v1610 = vrot.slane %v1596, %v1609
        %v1611 = vcombine.low %v1578, %v1594
        %v1612 = vcombine.high %v1578, %v1594
        %v1614 = vunpack.c.l.s4 1934713408
        %v1615 = vunpack.c.0.s8 %v1614
        %v1616 = vlaneseq
        %v1617 = vshrl.u32 %v1616, 7
        %v1618 = vsub.s32 %v1615, %v1617
        %v1619 = vrot.slane %v1611, %v1618
        %v1621 = vunpack.c.l.s4 1934713408
        %v1622 = vunpack.c.0.s8 %v1621
        %v1623 = vlaneseq
        %v1624 = vshrl.u32 %v1623, 7
        %v1625 = vsub.s32 %v1622, %v1624
        %v1626 = vrot.slane %v1612, %v1625
        %v1627 = vcombine.high %v1603, 0.0
        %v1628 = vcombine.high %v1610, 0.0
        %v1629 = vcombine.high %v1619, 0.0
        %v1630 = vcombine.high %v1626, 0.0
        %v1631 = vcombine.low %v1603, %v1610
        %v1633 = vunpack.c.l.s4 1983009808
        %v1634 = vunpack.c.0.s8 %v1633
        %v1635 = vlaneseq
        %v1636 = vshrl.u32 %v1635, 7
        %v1637 = vsub.s32 %v1634, %v1636
        %v1638 = vrot.slane %v1631, %v1637
        %v1639 = vcombine.low %v1627, %v1628
        %v1641 = vunpack.c.l.s4 1983009808
        %v1642 = vunpack.c.0.s8 %v1641
        %v1643 = vlaneseq
        %v1644 = vshrl.u32 %v1643, 7
        %v1645 = vsub.s32 %v1642, %v1644
        %v1646 = vrot.slane %v1639, %v1645
        %v1647 = vcombine.low %v1619, %v1626
        %v1649 = vunpack.c.l.s4 1983009808
        %v1650 = vunpack.c.0.s8 %v1649
        %v1651 = vlaneseq
        %v1652 = vshrl.u32 %v1651, 7
        %v1653 = vsub.s32 %v1650, %v1652
        %v1654 = vrot.slane %v1647, %v1653
        %v1655 = vcombine.low %v1629, %v1630
        %v1657 = vunpack.c.l.s4 1983009808
        %v1658 = vunpack.c.0.s8 %v1657
        %v1659 = vlaneseq
        %v1660 = vshrl.u32 %v1659, 7
        %v1661 = vsub.s32 %v1658, %v1660
        %v1662 = vrot.slane %v1655, %v1661
        %v1663 = vcombine.low %v1638, %v1646
        %v1664 = vcombine.high %v1638, %v1646
        %v1666 = vunpack.c.l.s4 1934713408
        %v1667 = vunpack.c.0.s8 %v1666
        %v1668 = vlaneseq
        %v1669 = vshrl.u32 %v1668, 7
        %v1670 = vsub.s32 %v1667, %v1669
        %v1671 = vrot.slane %v1663, %v1670
        %v1673 = vunpack.c.l.s4 1934713408
        %v1674 = vunpack.c.0.s8 %v1673
        %v1675 = vlaneseq
        %v1676 = vshrl.u32 %v1675, 7
        %v1677 = vsub.s32 %v1674, %v1676
        %v1678 = vrot.slane %v1664, %v1677
        %v1679 = vcombine.low %v1654, %v1662
        %v1680 = vcombine.high %v1654, %v1662
        %v1682 = vunpack.c.l.s4 1934713408
        %v1683 = vunpack.c.0.s8 %v1682
        %v1684 = vlaneseq
        %v1685 = vshrl.u32 %v1684, 7
        %v1686 = vsub.s32 %v1683, %v1685
        %v1687 = vrot.slane %v1679, %v1686
        %v1689 = vunpack.c.l.s4 1934713408
        %v1690 = vunpack.c.0.s8 %v1689
        %v1691 = vlaneseq
        %v1692 = vshrl.u32 %v1691, 7
        %v1693 = vsub.s32 %v1690, %v1692
        %v1694 = vrot.slane %v1680, %v1693
        %v1695 = vcombine.low %v1671, %v1687
        %v1696 = vcombine.high %v1671, %v1687
        %v1697 = vcombine.low %v1678, %v1694
        %v1698 = vcombine.high %v1678, %v1694
        %v1699 = vpack.c.bf16 %v1695, %v1695
        %v1700 = vpack.c.bf16 %v1696, %v1696
        %v1701 = vpack.c.bf16 %v1697, %v1697
        %v1702 = vpack.c.bf16 %v1698, %v1698
        %vm1703 = vcmask 261120
        %v1705 = vsel %vm1703, %v1399, 0
        %v1708 = vsel %vm1703, %v1549, 0
        %1710 = vmatprep.subr.bf16.mxu0 0
        %1711 = vmatpush1.bf16.xpose.msra.mxu0 %v1708
        %1712 = vmatprep.subr.bf16.mxu0 0
        %1713 = vmatpush1.bf16.xpose.msra.mxu0 0
        %1714 = vmatprep.subr.bf16.mxu0 0
        %1715 = vmatpush1.bf16.xpose.msra.mxu0 0
        %1716 = vmatprep.subr.bf16.mxu0 0
        %1717 = vmatpush1.bf16.xpose.msra.mxu0 0
        %1718 = vmatprep.subr.bf16.mxu0 0
        %1719 = vmatpush1.bf16.xpose.msra.mxu0 0
        %1720 = vmatprep.subr.bf16.mxu0 0
        %1721 = vmatpush1.bf16.xpose.msra.mxu0 0
        %1722 = vmatprep.subr.bf16.mxu0 0
        %1723 = vmatpush1.bf16.xpose.msra.mxu0 0
        %1724 = vmatprep.subr.bf16.mxu0 0
        %1725 = vmatpush1.bf16.xpose.msra.mxu0 0
        %1726 = vmatprep.subr.bf16.mxu0 0
        %1727 = vmatpush1.bf16.xpose.msra.mxu0 0
        %1728 = vmatprep.subr.bf16.mxu0 0
        %1729 = vmatpush1.bf16.xpose.msra.mxu0 0
        %1730 = vmatprep.subr.bf16.mxu0 0
        %1731 = vmatpush1.bf16.xpose.msra.mxu0 0
        %1732 = vmatprep.subr.bf16.mxu0 0
        %1733 = vmatpush1.bf16.xpose.msra.mxu0 0
        %1734 = vmatprep.subr.bf16.mxu0 0
        %1735 = vmatpush1.bf16.xpose.msra.mxu0 0
        %1736 = vmatprep.subr.bf16.mxu0 0
        %1737 = vmatpush1.bf16.xpose.msra.mxu0 0
        %1738 = vmatprep.subr.bf16.mxu0 0
        %1739 = vmatpush1.bf16.xpose.msra.mxu0 0
        %1740 = vmatprep.subr.bf16.mxu0 0
        %1741 = vmatpush1.bf16.xpose.msra.mxu0 0
        %1742 = vmatprep.mubr.bf16.mxu0 0
        %1743 = vmatmul.mubr.bf16.gmra.mrb[0].mxu0 %v1705
        %v1744 = vpop.f32.mrb[0].mxu0
        %v1745 = vadd.f32 0.0, %v1744
        %v1746 = vpop.f32.mrb[0].mxu0
        %v1747 = vpop.f32.mrb[0].mxu0
        %v1748 = vpop.f32.mrb[0].mxu0
        %1749 = vdwg.mxu0
        %v1751 = vsel %vm1703, %v1400, 0
        %v1754 = vsel %vm1703, %v1550, 0
        %1756 = vmatprep.subr.bf16.mxu0 0
        %1757 = vmatpush1.bf16.xpose.msra.mxu0 %v1754
        %1758 = vmatprep.subr.bf16.mxu0 0
        %1759 = vmatpush1.bf16.xpose.msra.mxu0 0
        %1760 = vmatprep.subr.bf16.mxu0 0
        %1761 = vmatpush1.bf16.xpose.msra.mxu0 0
        %1762 = vmatprep.subr.bf16.mxu0 0
        %1763 = vmatpush1.bf16.xpose.msra.mxu0 0
        %1764 = vmatprep.subr.bf16.mxu0 0
        %1765 = vmatpush1.bf16.xpose.msra.mxu0 0
        %1766 = vmatprep.subr.bf16.mxu0 0
        %1767 = vmatpush1.bf16.xpose.msra.mxu0 0
        %1768 = vmatprep.subr.bf16.mxu0 0
        %1769 = vmatpush1.bf16.xpose.msra.mxu0 0
        %1770 = vmatprep.subr.bf16.mxu0 0
        %1771 = vmatpush1.bf16.xpose.msra.mxu0 0
        %1772 = vmatprep.subr.bf16.mxu0 0
        %1773 = vmatpush1.bf16.xpose.msra.mxu0 0
        %1774 = vmatprep.subr.bf16.mxu0 0
        %1775 = vmatpush1.bf16.xpose.msra.mxu0 0
        %1776 = vmatprep.subr.bf16.mxu0 0
        %1777 = vmatpush1.bf16.xpose.msra.mxu0 0
        %1778 = vmatprep.subr.bf16.mxu0 0
        %1779 = vmatpush1.bf16.xpose.msra.mxu0 0
        %1780 = vmatprep.subr.bf16.mxu0 0
        %1781 = vmatpush1.bf16.xpose.msra.mxu0 0
        %1782 = vmatprep.subr.bf16.mxu0 0
        %1783 = vmatpush1.bf16.xpose.msra.mxu0 0
        %1784 = vmatprep.subr.bf16.mxu0 0
        %1785 = vmatpush1.bf16.xpose.msra.mxu0 0
        %1786 = vmatprep.subr.bf16.mxu0 0
        %1787 = vmatpush1.bf16.xpose.msra.mxu0 0
        %1788 = vmatprep.mubr.bf16.mxu0 0
        %1789 = vmatmul.mubr.bf16.gmra.mrb[0].mxu0 %v1751
        %v1790 = vpop.f32.mrb[0].mxu0
        %v1791 = vadd.f32 0.0, %v1790
        %v1792 = vpop.f32.mrb[0].mxu0
        %v1793 = vpop.f32.mrb[0].mxu0
        %v1794 = vpop.f32.mrb[0].mxu0
        %1795 = vdwg.mxu0
        %v1797 = vsel %vm1703, %v1401, 0
        %v1800 = vsel %vm1703, %v1551, 0
        %1802 = vmatprep.subr.bf16.mxu0 0
        %1803 = vmatpush1.bf16.xpose.msra.mxu0 %v1800
        %1804 = vmatprep.subr.bf16.mxu0 0
        %1805 = vmatpush1.bf16.xpose.msra.mxu0 0
        %1806 = vmatprep.subr.bf16.mxu0 0
        %1807 = vmatpush1.bf16.xpose.msra.mxu0 0
        %1808 = vmatprep.subr.bf16.mxu0 0
        %1809 = vmatpush1.bf16.xpose.msra.mxu0 0
        %1810 = vmatprep.subr.bf16.mxu0 0
        %1811 = vmatpush1.bf16.xpose.msra.mxu0 0
        %1812 = vmatprep.subr.bf16.mxu0 0
        %1813 = vmatpush1.bf16.xpose.msra.mxu0 0
        %1814 = vmatprep.subr.bf16.mxu0 0
        %1815 = vmatpush1.bf16.xpose.msra.mxu0 0
        %1816 = vmatprep.subr.bf16.mxu0 0
        %1817 = vmatpush1.bf16.xpose.msra.mxu0 0
        %1818 = vmatprep.subr.bf16.mxu0 0
        %1819 = vmatpush1.bf16.xpose.msra.mxu0 0
        %1820 = vmatprep.subr.bf16.mxu0 0
        %1821 = vmatpush1.bf16.xpose.msra.mxu0 0
        %1822 = vmatprep.subr.bf16.mxu0 0
        %1823 = vmatpush1.bf16.xpose.msra.mxu0 0
        %1824 = vmatprep.subr.bf16.mxu0 0
        %1825 = vmatpush1.bf16.xpose.msra.mxu0 0
        %1826 = vmatprep.subr.bf16.mxu0 0
        %1827 = vmatpush1.bf16.xpose.msra.mxu0 0
        %1828 = vmatprep.subr.bf16.mxu0 0
        %1829 = vmatpush1.bf16.xpose.msra.mxu0 0
        %1830 = vmatprep.subr.bf16.mxu0 0
        %1831 = vmatpush1.bf16.xpose.msra.mxu0 0
        %1832 = vmatprep.subr.bf16.mxu0 0
        %1833 = vmatpush1.bf16.xpose.msra.mxu0 0
        %1834 = vmatprep.mubr.bf16.mxu0 0
        %1835 = vmatmul.mubr.bf16.gmra.mrb[0].mxu0 %v1797
        %v1836 = vpop.f32.mrb[0].mxu0
        %v1837 = vadd.f32 0.0, %v1836
        %v1838 = vpop.f32.mrb[0].mxu0
        %v1839 = vpop.f32.mrb[0].mxu0
        %v1840 = vpop.f32.mrb[0].mxu0
        %1841 = vdwg.mxu0
        %v1843 = vsel %vm1703, %v1402, 0
        %v1846 = vsel %vm1703, %v1552, 0
        %1848 = vmatprep.subr.bf16.mxu0 0
        %1849 = vmatpush1.bf16.xpose.msra.mxu0 %v1846
        %1850 = vmatprep.subr.bf16.mxu0 0
        %1851 = vmatpush1.bf16.xpose.msra.mxu0 0
        %1852 = vmatprep.subr.bf16.mxu0 0
        %1853 = vmatpush1.bf16.xpose.msra.mxu0 0
        %1854 = vmatprep.subr.bf16.mxu0 0
        %1855 = vmatpush1.bf16.xpose.msra.mxu0 0
        %1856 = vmatprep.subr.bf16.mxu0 0
        %1857 = vmatpush1.bf16.xpose.msra.mxu0 0
        %1858 = vmatprep.subr.bf16.mxu0 0
        %1859 = vmatpush1.bf16.xpose.msra.mxu0 0
        %1860 = vmatprep.subr.bf16.mxu0 0
        %1861 = vmatpush1.bf16.xpose.msra.mxu0 0
        %1862 = vmatprep.subr.bf16.mxu0 0
        %1863 = vmatpush1.bf16.xpose.msra.mxu0 0
        %1864 = vmatprep.subr.bf16.mxu0 0
        %1865 = vmatpush1.bf16.xpose.msra.mxu0 0
        %1866 = vmatprep.subr.bf16.mxu0 0
        %1867 = vmatpush1.bf16.xpose.msra.mxu0 0
        %1868 = vmatprep.subr.bf16.mxu0 0
        %1869 = vmatpush1.bf16.xpose.msra.mxu0 0
        %1870 = vmatprep.subr.bf16.mxu0 0
        %1871 = vmatpush1.bf16.xpose.msra.mxu0 0
        %1872 = vmatprep.subr.bf16.mxu0 0
        %1873 = vmatpush1.bf16.xpose.msra.mxu0 0
        %1874 = vmatprep.subr.bf16.mxu0 0
        %1875 = vmatpush1.bf16.xpose.msra.mxu0 0
        %1876 = vmatprep.subr.bf16.mxu0 0
        %1877 = vmatpush1.bf16.xpose.msra.mxu0 0
        %1878 = vmatprep.subr.bf16.mxu0 0
        %1879 = vmatpush1.bf16.xpose.msra.mxu0 0
        %1880 = vmatprep.mubr.bf16.mxu0 0
        %1881 = vmatmul.mubr.bf16.gmra.mrb[0].mxu0 %v1843
        %v1882 = vpop.f32.mrb[0].mxu0
        %v1883 = vadd.f32 0.0, %v1882
        %v1884 = vpop.f32.mrb[0].mxu0
        %v1885 = vpop.f32.mrb[0].mxu0
        %v1886 = vpop.f32.mrb[0].mxu0
        %1887 = vdwg.mxu0
        %vm1888 = vcmask 64512
        %v1889 = vsel %vm1888, %v1745, -inf
        %1890 = vmax.xlane.f32.xlu0 %v1889
        %v1891 = vpop.xlane.xlu0 %1890
        %v1892 = vsel %vm1888, %v1791, -inf
        %1893 = vmax.xlane.f32.xlu0 %v1892
        %v1894 = vpop.xlane.xlu0 %1893
        %v1895 = vsel %vm1888, %v1837, -inf
        %1896 = vmax.xlane.f32.xlu0 %v1895
        %v1897 = vpop.xlane.xlu0 %1896
        %v1898 = vsel %vm1888, %v1883, -inf
        %1899 = vmax.xlane.f32.xlu0 %v1898
        %v1900 = vpop.xlane.xlu0 %1899
        %v1901 = vsub.f32 %v1745, %v1891
        %v1902 = vsub.f32 %v1791, %v1894
        %v1903 = vsub.f32 %v1837, %v1897
        %v1904 = vsub.f32 %v1883, %v1900
        %v1905 = vmul.f32 %v1901, 1.442695
        %v1906 = vpow.pop %v1905
        %v1907 = vmul.f32 %v1902, 1.442695
        %v1908 = vpow.pop %v1907
        %v1909 = vmul.f32 %v1903, 1.442695
        %v1910 = vpow.pop %v1909
        %v1911 = vmul.f32 %v1904, 1.442695
        %v1912 = vpow.pop %v1911
        %v1913 = vsel %vm1888, %v1906, 0.0
        %1914 = vadd.xlane.f32.xlu0 %v1913
        %v1915 = vpop.xlane.xlu0 %1914
        %v1916 = vsel %vm1888, %v1908, 0.0
        %1917 = vadd.xlane.f32.xlu0 %v1916
        %v1918 = vpop.xlane.xlu0 %1917
        %v1919 = vsel %vm1888, %v1910, 0.0
        %1920 = vadd.xlane.f32.xlu0 %v1919
        %v1921 = vpop.xlane.xlu0 %1920
        %v1922 = vsel %vm1888, %v1912, 0.0
        %1923 = vadd.xlane.f32.xlu0 %v1922
        %v1924 = vpop.xlane.xlu0 %1923
        %v1925 = vrcp.pop %v1915
        %v1926 = vrcp.pop %v1918
        %v1927 = vrcp.pop %v1921
        %v1928 = vrcp.pop %v1924
        %v1929 = vmul.f32 %v1906, %v1925
        %v1930 = vmul.f32 %v1908, %v1926
        %v1931 = vmul.f32 %v1910, %v1927
        %v1932 = vmul.f32 %v1912, %v1928
        %v1933 = vpack.c.bf16 %v1929, %v1929
        %v1934 = vpack.c.bf16 %v1930, %v1930
        %v1935 = vpack.c.bf16 %v1931, %v1931
        %v1936 = vpack.c.bf16 %v1932, %v1932
        %v1938 = vsel %vm1888, %v1933, 0
        %vm1940 = vcmask 1043456
        %v1942 = vsel %vm1940, %v1699, 0
        %1944 = vmatprep.subr.bf16.mxu0 0
        %1945 = vmatpush1.bf16.msra.mxu0 %v1942
        %1946 = vmatprep.subr.bf16.mxu0 0
        %1947 = vmatpush1.bf16.msra.mxu0 0
        %1948 = vmatprep.subr.bf16.mxu0 0
        %1949 = vmatpush1.bf16.msra.mxu0 0
        %1950 = vmatprep.subr.bf16.mxu0 0
        %1951 = vmatpush1.bf16.msra.mxu0 0
        %1952 = vmatprep.subr.bf16.mxu0 0
        %1953 = vmatpush1.bf16.msra.mxu0 0
        %1954 = vmatprep.subr.bf16.mxu0 0
        %1955 = vmatpush1.bf16.msra.mxu0 0
        %1956 = vmatprep.subr.bf16.mxu0 0
        %1957 = vmatpush1.bf16.msra.mxu0 0
        %1958 = vmatprep.subr.bf16.mxu0 0
        %1959 = vmatpush1.bf16.msra.mxu0 0
        %1960 = vmatprep.subr.bf16.mxu0 0
        %1961 = vmatpush1.bf16.msra.mxu0 0
        %1962 = vmatprep.subr.bf16.mxu0 0
        %1963 = vmatpush1.bf16.msra.mxu0 0
        %1964 = vmatprep.subr.bf16.mxu0 0
        %1965 = vmatpush1.bf16.msra.mxu0 0
        %1966 = vmatprep.subr.bf16.mxu0 0
        %1967 = vmatpush1.bf16.msra.mxu0 0
        %1968 = vmatprep.subr.bf16.mxu0 0
        %1969 = vmatpush1.bf16.msra.mxu0 0
        %1970 = vmatprep.subr.bf16.mxu0 0
        %1971 = vmatpush1.bf16.msra.mxu0 0
        %1972 = vmatprep.subr.bf16.mxu0 0
        %1973 = vmatpush1.bf16.msra.mxu0 0
        %1974 = vmatprep.subr.bf16.mxu0 0
        %1975 = vmatpush1.bf16.msra.mxu0 0
        %1976 = vmatprep.mubr.bf16.mxu0 0
        %1977 = vmatmul.mubr.bf16.gmra.mrb[0].mxu0 %v1938
        %v1978 = vpop.f32.mrb[0].mxu0
        %v1979 = vadd.f32 0.0, %v1978
        %v1980 = vpop.f32.mrb[0].mxu0
        %v1981 = vpop.f32.mrb[0].mxu0
        %v1982 = vpop.f32.mrb[0].mxu0
        %1983 = vdwg.mxu0
        %v1985 = vsel %vm1888, %v1934, 0
        %v1988 = vsel %vm1940, %v1700, 0
        %1990 = vmatprep.subr.bf16.mxu0 0
        %1991 = vmatpush1.bf16.msra.mxu0 %v1988
        %1992 = vmatprep.subr.bf16.mxu0 0
        %1993 = vmatpush1.bf16.msra.mxu0 0
        %1994 = vmatprep.subr.bf16.mxu0 0
        %1995 = vmatpush1.bf16.msra.mxu0 0
        %1996 = vmatprep.subr.bf16.mxu0 0
        %1997 = vmatpush1.bf16.msra.mxu0 0
        %1998 = vmatprep.subr.bf16.mxu0 0
        %1999 = vmatpush1.bf16.msra.mxu0 0
        %2000 = vmatprep.subr.bf16.mxu0 0
        %2001 = vmatpush1.bf16.msra.mxu0 0
        %2002 = vmatprep.subr.bf16.mxu0 0
        %2003 = vmatpush1.bf16.msra.mxu0 0
        %2004 = vmatprep.subr.bf16.mxu0 0
        %2005 = vmatpush1.bf16.msra.mxu0 0
        %2006 = vmatprep.subr.bf16.mxu0 0
        %2007 = vmatpush1.bf16.msra.mxu0 0
        %2008 = vmatprep.subr.bf16.mxu0 0
        %2009 = vmatpush1.bf16.msra.mxu0 0
        %2010 = vmatprep.subr.bf16.mxu0 0
        %2011 = vmatpush1.bf16.msra.mxu0 0
        %2012 = vmatprep.subr.bf16.mxu0 0
        %2013 = vmatpush1.bf16.msra.mxu0 0
        %2014 = vmatprep.subr.bf16.mxu0 0
        %2015 = vmatpush1.bf16.msra.mxu0 0
        %2016 = vmatprep.subr.bf16.mxu0 0
        %2017 = vmatpush1.bf16.msra.mxu0 0
        %2018 = vmatprep.subr.bf16.mxu0 0
        %2019 = vmatpush1.bf16.msra.mxu0 0
        %2020 = vmatprep.subr.bf16.mxu0 0
        %2021 = vmatpush1.bf16.msra.mxu0 0
        %2022 = vmatprep.mubr.bf16.mxu0 0
        %2023 = vmatmul.mubr.bf16.gmra.mrb[0].mxu0 %v1985
        %v2024 = vpop.f32.mrb[0].mxu0
        %v2025 = vadd.f32 0.0, %v2024
        %v2026 = vpop.f32.mrb[0].mxu0
        %v2027 = vpop.f32.mrb[0].mxu0
        %v2028 = vpop.f32.mrb[0].mxu0
        %2029 = vdwg.mxu0
        %v2031 = vsel %vm1888, %v1935, 0
        %v2034 = vsel %vm1940, %v1701, 0
        %2036 = vmatprep.subr.bf16.mxu0 0
        %2037 = vmatpush1.bf16.msra.mxu0 %v2034
        %2038 = vmatprep.subr.bf16.mxu0 0
        %2039 = vmatpush1.bf16.msra.mxu0 0
        %2040 = vmatprep.subr.bf16.mxu0 0
        %2041 = vmatpush1.bf16.msra.mxu0 0
        %2042 = vmatprep.subr.bf16.mxu0 0
        %2043 = vmatpush1.bf16.msra.mxu0 0
        %2044 = vmatprep.subr.bf16.mxu0 0
        %2045 = vmatpush1.bf16.msra.mxu0 0
        %2046 = vmatprep.subr.bf16.mxu0 0
        %2047 = vmatpush1.bf16.msra.mxu0 0
        %2048 = vmatprep.subr.bf16.mxu0 0
        %2049 = vmatpush1.bf16.msra.mxu0 0
        %2050 = vmatprep.subr.bf16.mxu0 0
        %2051 = vmatpush1.bf16.msra.mxu0 0
        %2052 = vmatprep.subr.bf16.mxu0 0
        %2053 = vmatpush1.bf16.msra.mxu0 0
        %2054 = vmatprep.subr.bf16.mxu0 0
        %2055 = vmatpush1.bf16.msra.mxu0 0
        %2056 = vmatprep.subr.bf16.mxu0 0
        %2057 = vmatpush1.bf16.msra.mxu0 0
        %2058 = vmatprep.subr.bf16.mxu0 0
        %2059 = vmatpush1.bf16.msra.mxu0 0
        %2060 = vmatprep.subr.bf16.mxu0 0
        %2061 = vmatpush1.bf16.msra.mxu0 0
        %2062 = vmatprep.subr.bf16.mxu0 0
        %2063 = vmatpush1.bf16.msra.mxu0 0
        %2064 = vmatprep.subr.bf16.mxu0 0
        %2065 = vmatpush1.bf16.msra.mxu0 0
        %2066 = vmatprep.subr.bf16.mxu0 0
        %2067 = vmatpush1.bf16.msra.mxu0 0
        %2068 = vmatprep.mubr.bf16.mxu0 0
        %2069 = vmatmul.mubr.bf16.gmra.mrb[0].mxu0 %v2031
        %v2070 = vpop.f32.mrb[0].mxu0
        %v2071 = vadd.f32 0.0, %v2070
        %v2072 = vpop.f32.mrb[0].mxu0
        %v2073 = vpop.f32.mrb[0].mxu0
        %v2074 = vpop.f32.mrb[0].mxu0
        %2075 = vdwg.mxu0
        %v2077 = vsel %vm1888, %v1936, 0
        %v2080 = vsel %vm1940, %v1702, 0
        %2082 = vmatprep.subr.bf16.mxu0 0
        %2083 = vmatpush1.bf16.msra.mxu0 %v2080
        %2084 = vmatprep.subr.bf16.mxu0 0
        %2085 = vmatpush1.bf16.msra.mxu0 0
        %2086 = vmatprep.subr.bf16.mxu0 0
        %2087 = vmatpush1.bf16.msra.mxu0 0
        %2088 = vmatprep.subr.bf16.mxu0 0
        %2089 = vmatpush1.bf16.msra.mxu0 0
        %2090 = vmatprep.subr.bf16.mxu0 0
        %2091 = vmatpush1.bf16.msra.mxu0 0
        %2092 = vmatprep.subr.bf16.mxu0 0
        %2093 = vmatpush1.bf16.msra.mxu0 0
        %2094 = vmatprep.subr.bf16.mxu0 0
        %2095 = vmatpush1.bf16.msra.mxu0 0
        %2096 = vmatprep.subr.bf16.mxu0 0
        %2097 = vmatpush1.bf16.msra.mxu0 0
        %2098 = vmatprep.subr.bf16.mxu0 0
        %2099 = vmatpush1.bf16.msra.mxu0 0
        %2100 = vmatprep.subr.bf16.mxu0 0
        %2101 = vmatpush1.bf16.msra.mxu0 0
        %2102 = vmatprep.subr.bf16.mxu0 0
        %2103 = vmatpush1.bf16.msra.mxu0 0
        %2104 = vmatprep.subr.bf16.mxu0 0
        %2105 = vmatpush1.bf16.msra.mxu0 0
        %2106 = vmatprep.subr.bf16.mxu0 0
        %2107 = vmatpush1.bf16.msra.mxu0 0
        %2108 = vmatprep.subr.bf16.mxu0 0
        %2109 = vmatpush1.bf16.msra.mxu0 0
        %2110 = vmatprep.subr.bf16.mxu0 0
        %2111 = vmatpush1.bf16.msra.mxu0 0
        %2112 = vmatprep.subr.bf16.mxu0 0
        %2113 = vmatpush1.bf16.msra.mxu0 0
        %2114 = vmatprep.mubr.bf16.mxu0 0
        %2115 = vmatmul.mubr.bf16.gmra.mrb[0].mxu0 %v2077
        %v2116 = vpop.f32.mrb[0].mxu0
        %v2117 = vadd.f32 0.0, %v2116
        %v2118 = vpop.f32.mrb[0].mxu0
        %v2119 = vpop.f32.mrb[0].mxu0
        %v2120 = vpop.f32.mrb[0].mxu0
        %2121 = vdwg.mxu0
        %v2122 = vcombine.low %v1979, %v2071
        %v2123 = vcombine.high %v1979, %v2071
        %v2125 = vunpack.c.l.s4 1983009808
        %v2126 = vunpack.c.0.s8 %v2125
        %v2127 = vlaneseq
        %v2128 = vshrl.u32 %v2127, 7
        %v2129 = vsub.s32 %v2126, %v2128
        %v2130 = vrot.slane %v2122, %v2129
        %v2132 = vunpack.c.l.s4 1983009808
        %v2133 = vunpack.c.0.s8 %v2132
        %v2134 = vlaneseq
        %v2135 = vshrl.u32 %v2134, 7
        %v2136 = vsub.s32 %v2133, %v2135
        %v2137 = vrot.slane %v2123, %v2136
        %v2138 = vcombine.low %v2025, %v2117
        %v2139 = vcombine.high %v2025, %v2117
        %v2141 = vunpack.c.l.s4 1983009808
        %v2142 = vunpack.c.0.s8 %v2141
        %v2143 = vlaneseq
        %v2144 = vshrl.u32 %v2143, 7
        %v2145 = vsub.s32 %v2142, %v2144
        %v2146 = vrot.slane %v2138, %v2145
        %v2148 = vunpack.c.l.s4 1983009808
        %v2149 = vunpack.c.0.s8 %v2148
        %v2150 = vlaneseq
        %v2151 = vshrl.u32 %v2150, 7
        %v2152 = vsub.s32 %v2149, %v2151
        %v2153 = vrot.slane %v2139, %v2152
        %v2154 = vcombine.low %v2130, %v2146
        %v2155 = vcombine.high %v2130, %v2146
        %v2157 = vunpack.c.l.s4 1934713408
        %v2158 = vunpack.c.0.s8 %v2157
        %v2159 = vlaneseq
        %v2160 = vshrl.u32 %v2159, 7
        %v2161 = vsub.s32 %v2158, %v2160
        %v2162 = vrot.slane %v2154, %v2161
        %v2164 = vunpack.c.l.s4 1934713408
        %v2165 = vunpack.c.0.s8 %v2164
        %v2166 = vlaneseq
        %v2167 = vshrl.u32 %v2166, 7
        %v2168 = vsub.s32 %v2165, %v2167
        %v2169 = vrot.slane %v2155, %v2168
        %v2170 = vcombine.low %v2137, %v2153
        %v2171 = vcombine.high %v2137, %v2153
        %v2173 = vunpack.c.l.s4 1934713408
        %v2174 = vunpack.c.0.s8 %v2173
        %v2175 = vlaneseq
        %v2176 = vshrl.u32 %v2175, 7
        %v2177 = vsub.s32 %v2174, %v2176
        %v2178 = vrot.slane %v2170, %v2177
        %v2180 = vunpack.c.l.s4 1934713408
        %v2181 = vunpack.c.0.s8 %v2180
        %v2182 = vlaneseq
        %v2183 = vshrl.u32 %v2182, 7
        %v2184 = vsub.s32 %v2181, %v2183
        %v2185 = vrot.slane %v2171, %v2184
        %v2186 = vcombine.high %v2162, 0.0
        %v2187 = vcombine.high %v2169, 0.0
        %v2188 = vcombine.high %v2178, 0.0
        %v2189 = vcombine.high %v2185, 0.0
        %v2190 = vcombine.low %v2162, %v2169
        %v2192 = vunpack.c.l.s4 1983009808
        %v2193 = vunpack.c.0.s8 %v2192
        %v2194 = vlaneseq
        %v2195 = vshrl.u32 %v2194, 7
        %v2196 = vsub.s32 %v2193, %v2195
        %v2197 = vrot.slane %v2190, %v2196
        %v2198 = vcombine.low %v2186, %v2187
        %v2200 = vunpack.c.l.s4 1983009808
        %v2201 = vunpack.c.0.s8 %v2200
        %v2202 = vlaneseq
        %v2203 = vshrl.u32 %v2202, 7
        %v2204 = vsub.s32 %v2201, %v2203
        %v2205 = vrot.slane %v2198, %v2204
        %v2206 = vcombine.low %v2178, %v2185
        %v2208 = vunpack.c.l.s4 1983009808
        %v2209 = vunpack.c.0.s8 %v2208
        %v2210 = vlaneseq
        %v2211 = vshrl.u32 %v2210, 7
        %v2212 = vsub.s32 %v2209, %v2211
        %v2213 = vrot.slane %v2206, %v2212
        %v2214 = vcombine.low %v2188, %v2189
        %v2216 = vunpack.c.l.s4 1983009808
        %v2217 = vunpack.c.0.s8 %v2216
        %v2218 = vlaneseq
        %v2219 = vshrl.u32 %v2218, 7
        %v2220 = vsub.s32 %v2217, %v2219
        %v2221 = vrot.slane %v2214, %v2220
        %v2222 = vcombine.low %v2197, %v2205
        %v2223 = vcombine.high %v2197, %v2205
        %v2225 = vunpack.c.l.s4 1934713408
        %v2226 = vunpack.c.0.s8 %v2225
        %v2227 = vlaneseq
        %v2228 = vshrl.u32 %v2227, 7
        %v2229 = vsub.s32 %v2226, %v2228
        %v2230 = vrot.slane %v2222, %v2229
        %v2232 = vunpack.c.l.s4 1934713408
        %v2233 = vunpack.c.0.s8 %v2232
        %v2234 = vlaneseq
        %v2235 = vshrl.u32 %v2234, 7
        %v2236 = vsub.s32 %v2233, %v2235
        %v2237 = vrot.slane %v2223, %v2236
        %v2238 = vcombine.low %v2213, %v2221
        %v2239 = vcombine.high %v2213, %v2221
        %v2241 = vunpack.c.l.s4 1934713408
        %v2242 = vunpack.c.0.s8 %v2241
        %v2243 = vlaneseq
        %v2244 = vshrl.u32 %v2243, 7
        %v2245 = vsub.s32 %v2242, %v2244
        %v2246 = vrot.slane %v2238, %v2245
        %v2248 = vunpack.c.l.s4 1934713408
        %v2249 = vunpack.c.0.s8 %v2248
        %v2250 = vlaneseq
        %v2251 = vshrl.u32 %v2250, 7
        %v2252 = vsub.s32 %v2249, %v2251
        %v2253 = vrot.slane %v2239, %v2252
        %v2254 = vcombine.low %v2230, %v2246
        %v2255 = vcombine.high %v2230, %v2246
        %v2256 = vcombine.low %v2237, %v2253
        %v2257 = vcombine.high %v2237, %v2253
        %2259 = vrot.lane.b32.xlu0 %v2255, 32
        %v2260 = vpop.permute.xlu0 %2259
        %2263 = vrot.lane.b32.xlu0 %v2256, 64
        %v2264 = vpop.permute.xlu0 %2263
        %2267 = vrot.lane.b32.xlu0 %v2257, 96
        %v2268 = vpop.permute.xlu0 %2267
        %v2270 = vsel %vm1703, %v2254, %v2260
        %vm2271 = vcmask 523264
        %v2272 = vsel %vm2271, %v2270, %v2264
        %vm2273 = vcmask 785408
        %v2274 = vsel %vm2273, %v2272, %v2268
        %v2275 = vpack.c.bf16 %v2274, %v2274
        %v2276 = vld [vmem:[%s735] sm:$0xf]
        %v2277 = vld [vmem:[%s735 + $0x4] sm:$0xf]
        %v2278 = vld [vmem:[%s735 + $0x8] sm:$0xf]
        %v2279 = vld [vmem:[%s735 + $0xc] sm:$0xf]
        %v2280 = vld [vmem:[%s735 + $0x10] sm:$0xf]
        %v2281 = vld [vmem:[%s735 + $0x14] sm:$0xf]
        %v2282 = vld [vmem:[%s735 + $0x18] sm:$0xf]
        %v2283 = vld [vmem:[%s735 + $0x1c] sm:$0xf]
        %v2284 = vld [vmem:[%s735 + $0x20] sm:$0xf]
        %v2285 = vld [vmem:[%s735 + $0x24] sm:$0xf]
        %v2286 = vld [vmem:[%s735 + $0x28] sm:$0xf]
        %v2287 = vld [vmem:[%s735 + $0x2c] sm:$0xf]
        %v2288 = vld [vmem:[%s735 + $0x30] sm:$0xf]
        %v2289 = vld [vmem:[%s735 + $0x34] sm:$0xf]
        %v2290 = vld [vmem:[%s735 + $0x38] sm:$0xf]
        %v2291 = vld [vmem:[%s735 + $0x3c] sm:$0xf]
        %v2292 = vld [vmem:[%s854] sm:$0x1]
        %v2294 = vlaneseq
        %v2295 = vshrl.u32 %v2294, 7
        %v2296 = vsub.s32 0, %v2295
        %v2297 = vrot.slane %v2292, %v2296
        %v2315 = vunpack.c.l.b16 %v2276
        %v2316 = vunpack.c.l.b16 %v2277
        %v2317 = vunpack.c.l.b16 %v2278
        %v2318 = vunpack.c.l.b16 %v2279
        %v2319 = vunpack.c.l.b16 %v2280
        %v2320 = vunpack.c.l.b16 %v2281
        %v2321 = vunpack.c.l.b16 %v2282
        %v2322 = vunpack.c.l.b16 %v2283
        %v2323 = vunpack.c.l.b16 %v2284
        %v2324 = vunpack.c.l.b16 %v2285
        %v2325 = vunpack.c.l.b16 %v2286
        %v2326 = vunpack.c.l.b16 %v2287
        %v2327 = vunpack.c.l.b16 %v2288
        %v2328 = vunpack.c.l.b16 %v2289
        %v2329 = vunpack.c.l.b16 %v2290
        %v2330 = vunpack.c.l.b16 %v2291
        %v2331 = vpack.c.b16 %v2316, %v2315
        %v2332 = vpack.c.b16 %v2318, %v2317
        %v2333 = vpack.c.b16 %v2320, %v2319
        %v2334 = vpack.c.b16 %v2322, %v2321
        %v2335 = vpack.c.b16 %v2324, %v2323
        %v2336 = vpack.c.b16 %v2326, %v2325
        %v2337 = vpack.c.b16 %v2328, %v2327
        %v2338 = vpack.c.b16 %v2330, %v2329
        %2347 = vmatprep.subr.bf16.mxu0 0
        %2348 = vmatpush1.bf16.msra.mxu0 %v2331
        %2349 = vmatprep.subr.bf16.mxu0 0
        %2350 = vmatpush1.bf16.msra.mxu0 %v2332
        %2351 = vmatprep.subr.bf16.mxu0 0
        %2352 = vmatpush1.bf16.msra.mxu0 %v2333
        %2353 = vmatprep.subr.bf16.mxu0 0
        %2354 = vmatpush1.bf16.msra.mxu0 %v2334
        %2355 = vmatprep.subr.bf16.mxu0 0
        %2356 = vmatpush1.bf16.msra.mxu0 %v2335
        %2357 = vmatprep.subr.bf16.mxu0 0
        %2358 = vmatpush1.bf16.msra.mxu0 %v2336
        %2359 = vmatprep.subr.bf16.mxu0 0
        %2360 = vmatpush1.bf16.msra.mxu0 %v2337
        %2361 = vmatprep.subr.bf16.mxu0 0
        %2362 = vmatpush1.bf16.msra.mxu0 %v2338
        %2363 = vmatprep.subr.bf16.mxu0 0
        %2364 = vmatpush1.bf16.msra.mxu0 0
        %2365 = vmatprep.subr.bf16.mxu0 0
        %2366 = vmatpush1.bf16.msra.mxu0 0
        %2367 = vmatprep.subr.bf16.mxu0 0
        %2368 = vmatpush1.bf16.msra.mxu0 0
        %2369 = vmatprep.subr.bf16.mxu0 0
        %2370 = vmatpush1.bf16.msra.mxu0 0
        %2371 = vmatprep.subr.bf16.mxu0 0
        %2372 = vmatpush1.bf16.msra.mxu0 0
        %2373 = vmatprep.subr.bf16.mxu0 0
        %2374 = vmatpush1.bf16.msra.mxu0 0
        %2375 = vmatprep.subr.bf16.mxu0 0
        %2376 = vmatpush1.bf16.msra.mxu0 0
        %2377 = vmatprep.subr.bf16.mxu0 0
        %2378 = vmatpush1.bf16.msra.mxu0 0
        %2379 = vmatprep.mubr.bf16.mxu0 0
        %2380 = vmatmul.mubr.bf16.gmra.mrb[0].mxu0 %v2275
        %v2381 = vpop.f32.mrb[0].mxu0
        %v2382 = vadd.f32 %v2297, %v2381
        %v2383 = vpop.f32.mrb[0].mxu0
        %v2384 = vpop.f32.mrb[0].mxu0
        %v2385 = vpop.f32.mrb[0].mxu0
        %2386 = vdwg.mxu0
        %v2387 = vadd.f32 %v992, %v2382
        %v2388 = vld [vmem:[%s857] sm:$0x1]
        %v2389 = vld [vmem:[%s860] sm:$0x1]
        %2390 = vadd.xlane.f32.xlu0 %v2387
        %v2391 = vpop.xlane.xlu0 %2390
        %v2392 = vrcp.pop 128.0
        %v2393 = vmul.f32 %v2391, %v2392
        %v2394 = vsub.f32 %v2387, %v2393
        %v2395 = vmul.f32 %v2394, %v2394
        %2396 = vadd.xlane.f32.xlu0 %v2395
        %v2397 = vpop.xlane.xlu0 %2396
        %v2398 = vmul.f32 %v2397, %v2392
        %v2399 = vadd.f32 %v2398, 1e-05
        %v2400 = vrsqrt.pop %v2399
        %v2401 = vmul.f32 %v2394, %v2400
        %v2403 = vlaneseq
        %v2404 = vshrl.u32 %v2403, 7
        %v2405 = vsub.s32 0, %v2404
        %v2406 = vrot.slane %v2388, %v2405
        %v2408 = vmul.f32 %v2401, %v2406
        %v2410 = vlaneseq
        %v2411 = vshrl.u32 %v2410, 7
        %v2412 = vsub.s32 0, %v2411
        %v2413 = vrot.slane %v2389, %v2412
        %v2415 = vadd.f32 %v2408, %v2413
        %v2416 = vpack.c.bf16 %v2415, %v2415
        %v2417 = vld [vmem:[%s744] sm:$0xf]
        %v2418 = vld [vmem:[%s744 + $0x4] sm:$0xf]
        %v2419 = vld [vmem:[%s744 + $0x8] sm:$0xf]
        %v2420 = vld [vmem:[%s744 + $0xc] sm:$0xf]
        %v2421 = vld [vmem:[%s744 + $0x10] sm:$0xf]
        %v2422 = vld [vmem:[%s744 + $0x14] sm:$0xf]
        %v2423 = vld [vmem:[%s744 + $0x18] sm:$0xf]
        %v2424 = vld [vmem:[%s744 + $0x1c] sm:$0xf]
        %v2425 = vld [vmem:[%s744 + $0x20] sm:$0xf]
        %v2426 = vld [vmem:[%s744 + $0x24] sm:$0xf]
        %v2427 = vld [vmem:[%s744 + $0x28] sm:$0xf]
        %v2428 = vld [vmem:[%s744 + $0x2c] sm:$0xf]
        %v2429 = vld [vmem:[%s744 + $0x30] sm:$0xf]
        %v2430 = vld [vmem:[%s744 + $0x34] sm:$0xf]
        %v2431 = vld [vmem:[%s744 + $0x38] sm:$0xf]
        %v2432 = vld [vmem:[%s744 + $0x3c] sm:$0xf]
        %v2433 = vld [vmem:[%s863] sm:$0x1]
        %v2435 = vlaneseq
        %v2436 = vshrl.u32 %v2435, 7
        %v2437 = vsub.s32 0, %v2436
        %v2438 = vrot.slane %v2433, %v2437
        %v2456 = vunpack.c.l.b16 %v2417
        %v2457 = vunpack.c.l.b16 %v2418
        %v2458 = vunpack.c.l.b16 %v2419
        %v2459 = vunpack.c.l.b16 %v2420
        %v2460 = vunpack.c.l.b16 %v2421
        %v2461 = vunpack.c.l.b16 %v2422
        %v2462 = vunpack.c.l.b16 %v2423
        %v2463 = vunpack.c.l.b16 %v2424
        %v2464 = vunpack.c.l.b16 %v2425
        %v2465 = vunpack.c.l.b16 %v2426
        %v2466 = vunpack.c.l.b16 %v2427
        %v2467 = vunpack.c.l.b16 %v2428
        %v2468 = vunpack.c.l.b16 %v2429
        %v2469 = vunpack.c.l.b16 %v2430
        %v2470 = vunpack.c.l.b16 %v2431
        %v2471 = vunpack.c.l.b16 %v2432
        %v2472 = vpack.c.b16 %v2457, %v2456
        %v2473 = vpack.c.b16 %v2459, %v2458
        %v2474 = vpack.c.b16 %v2461, %v2460
        %v2475 = vpack.c.b16 %v2463, %v2462
        %v2476 = vpack.c.b16 %v2465, %v2464
        %v2477 = vpack.c.b16 %v2467, %v2466
        %v2478 = vpack.c.b16 %v2469, %v2468
        %v2479 = vpack.c.b16 %v2471, %v2470
        %2488 = vmatprep.subr.bf16.mxu0 0
        %2489 = vmatpush1.bf16.msra.mxu0 %v2472
        %2490 = vmatprep.subr.bf16.mxu0 0
        %2491 = vmatpush1.bf16.msra.mxu0 %v2473
        %2492 = vmatprep.subr.bf16.mxu0 0
        %2493 = vmatpush1.bf16.msra.mxu0 %v2474
        %2494 = vmatprep.subr.bf16.mxu0 0
        %2495 = vmatpush1.bf16.msra.mxu0 %v2475
        %2496 = vmatprep.subr.bf16.mxu0 0
        %2497 = vmatpush1.bf16.msra.mxu0 %v2476
        %2498 = vmatprep.subr.bf16.mxu0 0
        %2499 = vmatpush1.bf16.msra.mxu0 %v2477
        %2500 = vmatprep.subr.bf16.mxu0 0
        %2501 = vmatpush1.bf16.msra.mxu0 %v2478
        %2502 = vmatprep.subr.bf16.mxu0 0
        %2503 = vmatpush1.bf16.msra.mxu0 %v2479
        %2504 = vmatprep.subr.bf16.mxu0 0
        %2505 = vmatpush1.bf16.msra.mxu0 0
        %2506 = vmatprep.subr.bf16.mxu0 0
        %2507 = vmatpush1.bf16.msra.mxu0 0
        %2508 = vmatprep.subr.bf16.mxu0 0
        %2509 = vmatpush1.bf16.msra.mxu0 0
        %2510 = vmatprep.subr.bf16.mxu0 0
        %2511 = vmatpush1.bf16.msra.mxu0 0
        %2512 = vmatprep.subr.bf16.mxu0 0
        %2513 = vmatpush1.bf16.msra.mxu0 0
        %2514 = vmatprep.subr.bf16.mxu0 0
        %2515 = vmatpush1.bf16.msra.mxu0 0
        %2516 = vmatprep.subr.bf16.mxu0 0
        %2517 = vmatpush1.bf16.msra.mxu0 0
        %2518 = vmatprep.subr.bf16.mxu0 0
        %2519 = vmatpush1.bf16.msra.mxu0 0
        %2520 = vmatprep.mubr.bf16.mxu0 0
        %2521 = vmatmul.mubr.bf16.gmra.mrb[0].mxu0 %v2416
        %v2522 = vpop.f32.mrb[0].mxu0
        %v2523 = vadd.f32 %v2438, %v2522
        %v2524 = vpop.f32.mrb[0].mxu0
        %v2525 = vpop.f32.mrb[0].mxu0
        %v2526 = vpop.f32.mrb[0].mxu0
        %2527 = vdwg.mxu0
        %v2528 = vmax.f32 %v2523, 0.0
        %v2529 = vpack.c.bf16 %v2528, %v2528
        %v2530 = vld [vmem:[%s753] sm:$0xf]
        %v2531 = vld [vmem:[%s753 + $0x4] sm:$0xf]
        %v2532 = vld [vmem:[%s753 + $0x8] sm:$0xf]
        %v2533 = vld [vmem:[%s753 + $0xc] sm:$0xf]
        %v2534 = vld [vmem:[%s753 + $0x10] sm:$0xf]
        %v2535 = vld [vmem:[%s753 + $0x14] sm:$0xf]
        %v2536 = vld [vmem:[%s753 + $0x18] sm:$0xf]
        %v2537 = vld [vmem:[%s753 + $0x1c] sm:$0xf]
        %v2538 = vld [vmem:[%s753 + $0x20] sm:$0xf]
        %v2539 = vld [vmem:[%s753 + $0x24] sm:$0xf]
        %v2540 = vld [vmem:[%s753 + $0x28] sm:$0xf]
        %v2541 = vld [vmem:[%s753 + $0x2c] sm:$0xf]
        %v2542 = vld [vmem:[%s753 + $0x30] sm:$0xf]
        %v2543 = vld [vmem:[%s753 + $0x34] sm:$0xf]
        %v2544 = vld [vmem:[%s753 + $0x38] sm:$0xf]
        %v2545 = vld [vmem:[%s753 + $0x3c] sm:$0xf]
        %v2546 = vld [vmem:[%s866] sm:$0x1]
        %v2548 = vlaneseq
        %v2549 = vshrl.u32 %v2548, 7
        %v2550 = vsub.s32 0, %v2549
        %v2551 = vrot.slane %v2546, %v2550
        %v2569 = vunpack.c.l.b16 %v2530
        %v2570 = vunpack.c.l.b16 %v2531
        %v2571 = vunpack.c.l.b16 %v2532
        %v2572 = vunpack.c.l.b16 %v2533
        %v2573 = vunpack.c.l.b16 %v2534
        %v2574 = vunpack.c.l.b16 %v2535
        %v2575 = vunpack.c.l.b16 %v2536
        %v2576 = vunpack.c.l.b16 %v2537
        %v2577 = vunpack.c.l.b16 %v2538
        %v2578 = vunpack.c.l.b16 %v2539
        %v2579 = vunpack.c.l.b16 %v2540
        %v2580 = vunpack.c.l.b16 %v2541
        %v2581 = vunpack.c.l.b16 %v2542
        %v2582 = vunpack.c.l.b16 %v2543
        %v2583 = vunpack.c.l.b16 %v2544
        %v2584 = vunpack.c.l.b16 %v2545
        %v2585 = vpack.c.b16 %v2570, %v2569
        %v2586 = vpack.c.b16 %v2572, %v2571
        %v2587 = vpack.c.b16 %v2574, %v2573
        %v2588 = vpack.c.b16 %v2576, %v2575
        %v2589 = vpack.c.b16 %v2578, %v2577
        %v2590 = vpack.c.b16 %v2580, %v2579
        %v2591 = vpack.c.b16 %v2582, %v2581
        %v2592 = vpack.c.b16 %v2584, %v2583
        %2601 = vmatprep.subr.bf16.mxu0 0
        %2602 = vmatpush1.bf16.msra.mxu0 %v2585
        %2603 = vmatprep.subr.bf16.mxu0 0
        %2604 = vmatpush1.bf16.msra.mxu0 %v2586
        %2605 = vmatprep.subr.bf16.mxu0 0
        %2606 = vmatpush1.bf16.msra.mxu0 %v2587
        %2607 = vmatprep.subr.bf16.mxu0 0
        %2608 = vmatpush1.bf16.msra.mxu0 %v2588
        %2609 = vmatprep.subr.bf16.mxu0 0
        %2610 = vmatpush1.bf16.msra.mxu0 %v2589
        %2611 = vmatprep.subr.bf16.mxu0 0
        %2612 = vmatpush1.bf16.msra.mxu0 %v2590
        %2613 = vmatprep.subr.bf16.mxu0 0
        %2614 = vmatpush1.bf16.msra.mxu0 %v2591
        %2615 = vmatprep.subr.bf16.mxu0 0
        %2616 = vmatpush1.bf16.msra.mxu0 %v2592
        %2617 = vmatprep.subr.bf16.mxu0 0
        %2618 = vmatpush1.bf16.msra.mxu0 0
        %2619 = vmatprep.subr.bf16.mxu0 0
        %2620 = vmatpush1.bf16.msra.mxu0 0
        %2621 = vmatprep.subr.bf16.mxu0 0
        %2622 = vmatpush1.bf16.msra.mxu0 0
        %2623 = vmatprep.subr.bf16.mxu0 0
        %2624 = vmatpush1.bf16.msra.mxu0 0
        %2625 = vmatprep.subr.bf16.mxu0 0
        %2626 = vmatpush1.bf16.msra.mxu0 0
        %2627 = vmatprep.subr.bf16.mxu0 0
        %2628 = vmatpush1.bf16.msra.mxu0 0
        %2629 = vmatprep.subr.bf16.mxu0 0
        %2630 = vmatpush1.bf16.msra.mxu0 0
        %2631 = vmatprep.subr.bf16.mxu0 0
        %2632 = vmatpush1.bf16.msra.mxu0 0
        %2633 = vmatprep.mubr.bf16.mxu0 0
        %2634 = vmatmul.mubr.bf16.gmra.mrb[0].mxu0 %v2529
        %v2635 = vpop.f32.mrb[0].mxu0
        %v2636 = vadd.f32 %v2551, %v2635
        %v2637 = vpop.f32.mrb[0].mxu0
        %v2638 = vpop.f32.mrb[0].mxu0
        %v2639 = vpop.f32.mrb[0].mxu0
        %2640 = vdwg.mxu0
        %v2641 = vadd.f32 %v2415, %v2636
        %v2642 = vld [vmem:[%s869] sm:$0x1]
        %v2643 = vld [vmem:[%s872] sm:$0x1]
        %2644 = vadd.xlane.f32.xlu0 %v2641
        %v2645 = vpop.xlane.xlu0 %2644
        %v2646 = vmul.f32 %v2645, %v2392
        %v2647 = vsub.f32 %v2641, %v2646
        %v2648 = vmul.f32 %v2647, %v2647
        %2649 = vadd.xlane.f32.xlu0 %v2648
        %v2650 = vpop.xlane.xlu0 %2649
        %v2651 = vmul.f32 %v2650, %v2392
        %v2652 = vadd.f32 %v2651, 1e-05
        %v2653 = vrsqrt.pop %v2652
        %v2654 = vmul.f32 %v2647, %v2653
        %v2656 = vlaneseq
        %v2657 = vshrl.u32 %v2656, 7
        %v2658 = vsub.s32 0, %v2657
        %v2659 = vrot.slane %v2642, %v2658
        %v2661 = vmul.f32 %v2654, %v2659
        %v2663 = vlaneseq
        %v2664 = vshrl.u32 %v2663, 7
        %v2665 = vsub.s32 0, %v2664
        %v2666 = vrot.slane %v2643, %v2665
        %v2668 = vadd.f32 %v2661, %v2666
        %2669 = vst [vmem:[#allocation2] sm:$0xff] %v2668
        %p2670 = scmp.eq.s32.totalorder %s48, 1
        // Predicated region
        $region121: #{tpu_custom_call.1} parent=87 // pred_check
          %p2671 = pneg %p2670
        $region122: #{tpu_custom_call.1} parent=87 // pred_check_branch
          %2673 = sbr.rel (%p2671) target = $region124
        $region123: #{tpu_custom_call.1} parent=87 // pred_region
          %v2674 = vld [vmem:[%s15] sm:$0x1]
          %v2675 = vpack.c.bf16 %v2668, %v2668
          %v2676 = vld [vmem:[#allocation3] sm:$0x1]
          %2678 = vset.pattern.permute.xlu0 0
          %2679 = vperm.xlu0 %2678, %v2676
          %v2680 = vpop.permute.xlu0 %2679
          %v2682 = vlaneseq
          %v2683 = vshrl.u32 %v2682, 7
          %v2684 = vsub.s32 0, %v2683
          %v2685 = vrot.slane %v2680, %v2684
          %2686 = vmatprep.subr.bf16.mxu0 0
          %2687 = vmatpush1.bf16.xpose.msra.mxu0 %v2675
          %2688 = vmatprep.subr.bf16.mxu0 0
          %2689 = vmatpush1.bf16.xpose.msra.mxu0 0
          %2690 = vmatprep.subr.bf16.mxu0 0
          %2691 = vmatpush1.bf16.xpose.msra.mxu0 0
          %2692 = vmatprep.subr.bf16.mxu0 0
          %2693 = vmatpush1.bf16.xpose.msra.mxu0 0
          %2694 = vmatprep.subr.bf16.mxu0 0
          %2695 = vmatpush1.bf16.xpose.msra.mxu0 0
          %2696 = vmatprep.subr.bf16.mxu0 0
          %2697 = vmatpush1.bf16.xpose.msra.mxu0 0
          %2698 = vmatprep.subr.bf16.mxu0 0
          %2699 = vmatpush1.bf16.xpose.msra.mxu0 0
          %2700 = vmatprep.subr.bf16.mxu0 0
          %2701 = vmatpush1.bf16.xpose.msra.mxu0 0
          %2702 = vmatprep.subr.bf16.mxu0 0
          %2703 = vmatpush1.bf16.xpose.msra.mxu0 0
          %2704 = vmatprep.subr.bf16.mxu0 0
          %2705 = vmatpush1.bf16.xpose.msra.mxu0 0
          %2706 = vmatprep.subr.bf16.mxu0 0
          %2707 = vmatpush1.bf16.xpose.msra.mxu0 0
          %2708 = vmatprep.subr.bf16.mxu0 0
          %2709 = vmatpush1.bf16.xpose.msra.mxu0 0
          %2710 = vmatprep.subr.bf16.mxu0 0
          %2711 = vmatpush1.bf16.xpose.msra.mxu0 0
          %2712 = vmatprep.subr.bf16.mxu0 0
          %2713 = vmatpush1.bf16.xpose.msra.mxu0 0
          %2714 = vmatprep.subr.bf16.mxu0 0
          %2715 = vmatpush1.bf16.xpose.msra.mxu0 0
          %2716 = vmatprep.subr.bf16.mxu0 0
          %2717 = vmatpush1.bf16.xpose.msra.mxu0 0
          %2718 = vmatprep.mubr.bf16.mxu0 0
          %2719 = vmatmul.mubr.bf16.gmra.mrb[0].mxu0 %v2674
          %v2720 = vpop.f32.mrb[0].mxu0
          %v2721 = vadd.f32 %v2685, %v2720
          %v2722 = vpop.f32.mrb[0].mxu0
          %v2723 = vpop.f32.mrb[0].mxu0
          %v2724 = vpop.f32.mrb[0].mxu0
          %2725 = vdwg.mxu0
          %vm2726 = vcmask 57344
          %v2727 = vsel %vm2726, %v2721, -inf
          %2728 = vmax.xlane.f32.xlu0 %v2727
          %v2729 = vpop.xlane.xlu0 %2728
          %v2730 = vsub.f32 %v2721, %v2729
          %v2731 = vmul.f32 %v2730, 1.442695
          %v2732 = vpow.pop %v2731
          %v2733 = vsel %vm2726, %v2732, 0.0
          %2734 = vadd.xlane.f32.xlu0 %v2733
          %v2735 = vpop.xlane.xlu0 %2734
          %v2736 = vrcp.pop %v2735
          %v2737 = vmul.f32 %v2732, %v2736
          %2738 = vst.msk [vmem:[%s847] sm:$0x1] %vm2726, %v2737
        $region124: #{tpu_custom_call.1} parent=87 // pred_fallthru
          _
        %s2739 = sand.u32 %s485, 1
        %s2740 = scalar_lea.sflag [#allocation6], %s2739
        %s2741 = sand.u32 %s485, 1
        %s2742 = scalar_lea.vmem [#allocation16], %s2741
        // Predicated region
        $region125: #{tpu_custom_call.1} parent=87 // pred_check
          %p2743 = pneg %p495
        $region126: #{tpu_custom_call.1} parent=87 // pred_check_branch
          %2745 = sbr.rel (%p2743) target = $region128
        $region127: #{tpu_custom_call.1} parent=87 // pred_region
          %s2747 = ssub.s32 16, 16
          %2748 = vsyncadd %s2740, %s2747
          %s2749 = smul.addr %s47, 16
          %s2750 = scalar_lea.hbm %s17, %s2749
          %s2752 = sshll.u32 %s2742, 4
          %s2753 = int_to_ptr.vmem [resolvable:$true] %s2752
          %2755 = dma.vmem_to_hbm [thread:$0]  %s2753, 16, %s2750, %s2740
        $region128: #{tpu_custom_call.1} parent=87 // pred_fallthru
          _
      $region88: #{tpu_custom_call.1} parent=5 // pred_fallthru
        _
      %p2756 = scmp.le.s32.totalorder 2, %s38
      // Predicated region
      $region129: #{tpu_custom_call.1} parent=5 // pred_check
        %p2757 = pneg %p2756
      $region130: #{tpu_custom_call.1} parent=5 // pred_check_branch
        %2759 = sbr.rel (%p2757) target = $region132
      $region131: #{tpu_custom_call.1} parent=5 // pred_region
        %s2760 = ssub.s32 %s38, 2
        // Predicated region
        $region133: #{tpu_custom_call.1} parent=131 // pred_check
          %p2761 = pneg %p501
        $region134: #{tpu_custom_call.1} parent=131 // pred_check_branch
          %2763 = sbr.rel (%p2761) target = $region136
        $region135: #{tpu_custom_call.1} parent=131 // pred_region
          %s2764 = sand.u32 %s486, 1
          %s2765 = scalar_lea.sflag [#allocation6], %s2764
          %s2766 = sand.u32 %s486, 1
          %s2767 = scalar_lea.vmem [#allocation16], %s2766
          %2768 = dma.done %s2765, 16
        $region136: #{tpu_custom_call.1} parent=131 // pred_fallthru
          _
      $region132: #{tpu_custom_call.1} parent=5 // pred_fallthru
        _
    $region6: #{tpu_custom_call.1} parent=1 // loop_footer
      %s42 = sadd.s32 1, %s38
    $region7: #{tpu_custom_call.1} parent=1 // loop_footer_branch
      %37 = sbr.rel target = $region3
    $region8: #{tpu_custom_call.1} parent=1 // loop_exit
      _
    %2769 = vsyncpa [#allocation5], 1
    %s2770 = scalar_lea.sflag [#allocation5], 1
    %2771 = vsyncpa %s2770, 1
    %2772 = vsyncpa [#allocation8], 1
    %2773 = vsyncpa [#allocation11], 1
    %s2774 = scalar_lea.sflag [#allocation11], 1
    %2775 = vsyncpa %s2774, 1
    %2776 = vsyncpa [#allocation14], 1
    %s2777 = scalar_lea.sflag [#allocation14], 1
    %2778 = vsyncpa %s2777, 1
    %2779 = vsyncpa [#allocation6], 1
    %s2780 = scalar_lea.sflag [#allocation6], 1
    %2781 = vsyncpa %s2780, 1

</llo_original>
